<compile_context>
chip_gen: v7x
topology: tpu7x:2x2x1
jax: 0.10.0
libtpu: 0.0.40
codegen_flags: <defaults>
</compile_context>

<pallas_src>
import functools
import math

import jax
import jax.numpy as jnp
from jax import lax
from jax.experimental import pallas as pl
from jax.experimental.pallas import tpu as pltpu

BN_EPS = 1e-5


def _round_up(x, m):
    return (x + m - 1) // m * m


def _vmem_capacity_bytes():
    try:
        cap = int(pltpu.get_tpu_info().vmem_capacity_bytes)
        if cap >= 8 * 1024 * 1024:
            return cap
    except Exception:
        pass
    return 64 * 1024 * 1024            # conservative default (v7x per-TC VMEM)


def _pick_tk(K):
    Kp = _round_up(K, 128)
    if Kp <= 2048:
        return Kp, Kp                  # single K step
    Kp = _round_up(K, 256)
    TK = 2048
    while Kp % TK:
        TK -= 256                      # multiple of 256 (MXU-friendly), divides Kp
    return Kp, TK


def _pick_tm(M, fixed_bytes, per_row_bytes, budget):
    """Largest TM (multiple of 16) within the VMEM budget; prefer an even
    (>=4) number of M grid steps with TM >= 128 (v7x megacore balance)."""
    cands = (1024, 768, 512, 384, 256, 192, 128, 96, 64, 48, 32, 16)
    fit = [c for c in cands if fixed_bytes + c * per_row_bytes <= budget]
    if not fit:
        return 16
    for c in fit:                      # descending: first hit is the largest
        steps = -(-M // c)
        if c >= 128 and steps >= 4 and steps % 2 == 0:
            return c
    # fallback: minimize padded rows, prefer larger tiles on ties
    return min(fit, key=lambda c: (_round_up(M, c), -c))


# ---------------------------------------------------------------------------
# Pallas kernels
# ---------------------------------------------------------------------------
def _gemm_affine_kernel(p_ref, w_ref, sc_ref, sh_ref, o_ref):
    # single K step: no accumulator scratch, no pl.when phases
    acc = jnp.dot(p_ref[...], w_ref[...], preferred_element_type=jnp.float32)
    o_ref[...] = (acc * sc_ref[...] + sh_ref[...]).astype(o_ref.dtype)


def _gemm_affine_acc_kernel(p_ref, w_ref, sc_ref, sh_ref, o_ref, acc_ref):
    k = pl.program_id(1)

    @pl.when(k == 0)
    def _():
        acc_ref[...] = jnp.zeros_like(acc_ref)

    acc_ref[...] += jnp.dot(p_ref[...], w_ref[...],
                            preferred_element_type=jnp.float32)

    @pl.when(k == pl.num_programs(1) - 1)
    def _():
        o_ref[...] = (acc_ref[...] * sc_ref[...] + sh_ref[...]).astype(o_ref.dtype)


def _gemm_fused1x1_kernel(p_ref, w_ref, w3_ref, b3_ref, o_ref):
    # conv2 GEMM + (BN2, conv3 1x1) fused into the epilogue
    acc = jnp.dot(p_ref[...], w_ref[...], preferred_element_type=jnp.float32)
    o_ref[...] = jnp.dot(acc.astype(jnp.bfloat16), w3_ref[...],
                         preferred_element_type=jnp.float32) + b3_ref[...]


def _gemm_fused1x1_acc_kernel(p_ref, w_ref, w3_ref, b3_ref, o_ref, acc_ref):
    k = pl.program_id(1)

    @pl.when(k == 0)
    def _():
        acc_ref[...] = jnp.zeros_like(acc_ref)

    acc_ref[...] += jnp.dot(p_ref[...], w_ref[...],
                            preferred_element_type=jnp.float32)

    @pl.when(k == pl.num_programs(1) - 1)
    def _():
        o_ref[...] = jnp.dot(acc_ref[...].astype(jnp.bfloat16), w3_ref[...],
                             preferred_element_type=jnp.float32) + b3_ref[...]


# ---------------------------------------------------------------------------
# pallas_call wrappers
# ---------------------------------------------------------------------------
def conv_gemm_affine(patches, w_bf16, scale, shift):
    """bf16 (M,K)@(K,N), f32 accumulate, epilogue *scale + shift, bf16 out."""
    M, K = patches.shape
    Kw, N = w_bf16.shape
    assert Kw == K
    Np = _round_up(N, 128)
    Kp, TK = _pick_tk(K)
    nk = Kp // TK

    cap = _vmem_capacity_bytes()
    budget = int(cap * 0.70)
    per_row = 2 * TK * 2 + 2 * Np * 2 + (Np * 4 if nk > 1 else 0)
    fixed = 2 * TK * Np * 2 + 4 * Np * 4
    TM = _pick_tm(M, fixed, per_row, budget)
    Mp = _round_up(M, TM)

    p = jnp.pad(patches.astype(jnp.bfloat16), ((0, Mp - M), (0, Kp - K)))
    w = jnp.pad(w_bf16, ((0, Kp - K), (0, Np - N)))
    sc = jnp.pad(scale.astype(jnp.float32), (0, Np - N)).reshape(1, Np)
    sh = jnp.pad(shift.astype(jnp.float32), (0, Np - N)).reshape(1, Np)

    vmem_use = fixed + TM * per_row
    vmem_limit = int(min(cap * 85 // 100,
                         max(32 * 1024 * 1024, vmem_use + (4 << 20))))

    if nk == 1:
        grid = (Mp // TM,)
        in_specs = [pl.BlockSpec((TM, Kp), lambda i: (i, 0)),
                    pl.BlockSpec((Kp, Np), lambda i: (0, 0)),
                    pl.BlockSpec((1, Np), lambda i: (0, 0)),
                    pl.BlockSpec((1, Np), lambda i: (0, 0))]
        out_specs = pl.BlockSpec((TM, Np), lambda i: (i, 0))
        scratch, kernel, dims = [], _gemm_affine_kernel, ("parallel",)
    else:
        grid = (Mp // TM, nk)
        in_specs = [pl.BlockSpec((TM, TK), lambda i, kk: (i, kk)),
                    pl.BlockSpec((TK, Np), lambda i, kk: (kk, 0)),
                    pl.BlockSpec((1, Np), lambda i, kk: (0, 0)),
                    pl.BlockSpec((1, Np), lambda i, kk: (0, 0))]
        out_specs = pl.BlockSpec((TM, Np), lambda i, kk: (i, 0))
        scratch = [pltpu.VMEM((TM, Np), jnp.float32)]
        kernel, dims = _gemm_affine_acc_kernel, ("parallel", "arbitrary")

    out = pl.pallas_call(
        kernel,
        out_shape=jax.ShapeDtypeStruct((Mp, Np), jnp.bfloat16),
        grid_spec=pltpu.PrefetchScalarGridSpec(
            num_scalar_prefetch=0, grid=grid,
            in_specs=in_specs, out_specs=out_specs, scratch_shapes=scratch),
        compiler_params=pltpu.CompilerParams(
            dimension_semantics=dims, vmem_limit_bytes=vmem_limit),
    )(p, w, sc, sh)
    return out[:M, :N]


def conv_gemm_fused1x1(patches, w2_bf16, w3_bf16, b3_f32):
    """bf16 (M,K)@(K,N2), f32 accumulate, epilogue @(N2,N3)+b3 (1x1 conv), f32 out."""
    M, K = patches.shape
    Kw, N2 = w2_bf16.shape
    N2w, N3 = w3_bf16.shape
    assert Kw == K and N2w == N2
    Np2 = _round_up(N2, 128)
    Np3 = _round_up(N3, 128)
    Kp, TK = _pick_tk(K)
    nk = Kp // TK

    cap = _vmem_capacity_bytes()
    budget = int(cap * 0.70)
    per_row = 2 * TK * 2 + 2 * Np3 * 4 + (Np2 * 4 if nk > 1 else 0)
    fixed = 2 * TK * Np2 * 2 + 2 * Np2 * Np3 * 2 + 2 * Np3 * 4
    TM = _pick_tm(M, fixed, per_row, budget)
    Mp = _round_up(M, TM)

    p = jnp.pad(patches.astype(jnp.bfloat16), ((0, Mp - M), (0, Kp - K)))
    w2 = jnp.pad(w2_bf16, ((0, Kp - K), (0, Np2 - N2)))
    w3 = jnp.pad(w3_bf16, ((0, Np2 - N2), (0, Np3 - N3)))
    b3 = jnp.pad(b3_f32.astype(jnp.float32), (0, Np3 - N3)).reshape(1, Np3)

    vmem_use = fixed + TM * per_row
    vmem_limit = int(min(cap * 85 // 100,
                         max(32 * 1024 * 1024, vmem_use + (4 << 20))))

    if nk == 1:
        grid = (Mp // TM,)
        in_specs = [pl.BlockSpec((TM, Kp), lambda i: (i, 0)),
                    pl.BlockSpec((Kp, Np2), lambda i: (0, 0)),
                    pl.BlockSpec((Np2, Np3), lambda i: (0, 0)),
                    pl.BlockSpec((1, Np3), lambda i: (0, 0))]
        out_specs = pl.BlockSpec((TM, Np3), lambda i: (i, 0))
        scratch, kernel, dims = [], _gemm_fused1x1_kernel, ("parallel",)
    else:
        grid = (Mp // TM, nk)
        in_specs = [pl.BlockSpec((TM, TK), lambda i, kk: (i, kk)),
                    pl.BlockSpec((TK, Np2), lambda i, kk: (kk, 0)),
                    pl.BlockSpec((Np2, Np3), lambda i, kk: (0, 0)),
                    pl.BlockSpec((1, Np3), lambda i, kk: (0, 0))]
        out_specs = pl.BlockSpec((TM, Np3), lambda i, kk: (i, 0))
        scratch = [pltpu.VMEM((TM, Np2), jnp.float32)]
        kernel, dims = _gemm_fused1x1_acc_kernel, ("parallel", "arbitrary")

    out = pl.pallas_call(
        kernel,
        out_shape=jax.ShapeDtypeStruct((Mp, Np3), jnp.float32),
        grid_spec=pltpu.PrefetchScalarGridSpec(
            num_scalar_prefetch=0, grid=grid,
            in_specs=in_specs, out_specs=out_specs, scratch_shapes=scratch),
        compiler_params=pltpu.CompilerParams(
            dimension_semantics=dims, vmem_limit_bytes=vmem_limit),
    )(p, w2, w3, b3)
    return out[:M, :N3]


# ---------------------------------------------------------------------------
# NHWC im2col (channels-last, bf16, column order = (kh, kw, cin))
# ---------------------------------------------------------------------------
def _im2col_nhwc(x_padded, k, dilation):
    B, Hp, Wp, C = x_padded.shape
    Ho = Hp - dilation * (k - 1)
    Wo = Wp - dilation * (k - 1)
    if k == 1:
        return x_padded.reshape(B * Ho * Wo, C), Ho, Wo
    cols = []
    for di in range(k):
        for dj in range(k):
            cols.append(x_padded[:, di * dilation:di * dilation + Ho,
                                 dj * dilation:dj * dilation + Wo, :])
    p = jnp.stack(cols, axis=3)                   # (B, Ho, Wo, k*k, C)
    return p.reshape(B * Ho * Wo, k * k * C), Ho, Wo


# ---------------------------------------------------------------------------
# One-time parameter preparation (BN affines, GEMM weight layout, 1x1 fold)
# ---------------------------------------------------------------------------
def prepare_block(params, kernel_size=3, dilation_rate=1):
    k = kernel_size

    def bn_affine(bn):
        gamma, beta, mean, var = bn
        s = gamma * lax.rsqrt(var + BN_EPS)
        return s, beta - mean * s

    s0, t0 = bn_affine(params["bn0"])
    s1, t1 = bn_affine(params["bn1"])
    s2, t2 = bn_affine(params["bn2"])

    w1, b1 = params["conv1"]                      # (half, numIn, k, k)
    w2, b2 = params["conv2"]                      # (half, half,  k, k)
    w3, b3 = params["conv3"]                      # (numOut, half, 1, 1)

    def to_gemm(w):                               # OIHW -> (kh*kw*cin, cout)
        return jnp.transpose(w, (2, 3, 1, 0)).reshape(-1, w.shape[0])

    # Layer-1 epilogue: BN1((patches@W1) + b1) = acc*s1 + (b1*s1 + t1)
    scale1 = s1.astype(jnp.float32)
    shift1 = (b1 * s1 + t1).astype(jnp.float32)

    # Layer-2/3 fused epilogue:
    #   out = (((patches@W2) + b2)*s2 + t2) @ W3m + b3
    #       = acc @ (s2[:,None]*W3m) + ((b2*s2 + t2) @ W3m + b3)
    w3m = w3[:, :, 0, 0].T                        # (half, numOut)
    w3_fold = (w3m * s2[:, None]).astype(jnp.bfloat16)
    b3_fold = (b3 + (b2 * s2 + t2) @ w3m).astype(jnp.float32)

    arrays = {
        "s0": s0.astype(jnp.float32), "t0": t0.astype(jnp.float32),
        "w1": to_gemm(w1).astype(jnp.bfloat16), "scale1": scale1, "shift1": shift1,
        "w2": to_gemm(w2).astype(jnp.bfloat16), "w3": w3_fold, "b3": b3_fold,
    }
    meta = {"k": k, "d": dilation_rate, "pad1": k // 2,
            "pad2": (k + (k - 1) * (dilation_rate - 1)) // 2}
    return arrays, meta


# ---------------------------------------------------------------------------
# Forward (Pallas path)
# ---------------------------------------------------------------------------
def conv_block_noact_forward(x_nchw, arrays, *, k, d, pad1, pad2):
    x = jnp.transpose(x_nchw, (0, 2, 3, 1))       # NHWC once
    B, H, W, _ = x.shape

    # BN0 on the input, then cast bf16 BEFORE zero-padding/im2col
    # (pad-after-BN matches PyTorch; bf16-first keeps the k^2 patch buffer bf16).
    a0 = (x * arrays["s0"] + arrays["t0"]).astype(jnp.bfloat16)

    # conv1 (k x k, dil=1) with BN1 fused into the GEMM epilogue -> bf16
    a0p = jnp.pad(a0, ((0, 0), (pad1, pad1), (pad1, pad1), (0, 0)))
    p1, Ho, Wo = _im2col_nhwc(a0p, k, 1)
    half = arrays["w1"].shape[1]
    a2 = conv_gemm_affine(p1, arrays["w1"], arrays["scale1"], arrays["shift1"])
    a2 = a2.reshape(B, Ho, Wo, half)

    # conv2 (k x k, dil=d) with BN2 + conv3(1x1) fused into the epilogue -> f32
    a2p = jnp.pad(a2, ((0, 0), (pad2, pad2), (pad2, pad2), (0, 0)))
    p2, Ho2, Wo2 = _im2col_nhwc(a2p, k, d)
    y = conv_gemm_fused1x1(p2, arrays["w2"], arrays["w3"], arrays["b3"])
    y = y.reshape(B, Ho2, Wo2, -1)
    return jnp.transpose(y, (0, 3, 1, 2))         # back to NCHW once


# ---------------------------------------------------------------------------
# Pure-JAX reference (f32, lax convs)
# ---------------------------------------------------------------------------
def _ref_bn(x, bn):
    gamma, beta, mean, var = bn
    s = gamma / jnp.sqrt(var + BN_EPS)
    return x * s[None, :, None, None] + (beta - mean * s)[None, :, None, None]


def _ref_conv(x, conv, dilation, pad):
    w, b = conv
    z = lax.conv_general_dilated(
        x, w, (1, 1), [(pad, pad), (pad, pad)],
        rhs_dilation=(dilation, dilation),
        dimension_numbers=("NCHW", "OIHW", "NCHW"))
    return z + b[None, :, None, None]


def conv_block_noact_reference(x, params, *, kernel_size=3, dilation_rate=1):
    k = kernel_size
    x = _ref_bn(x, params["bn0"])
    x = _ref_conv(x, params["conv1"], 1, k // 2)
    x = _ref_bn(x, params["bn1"])
    pad2 = (k + (k - 1) * (dilation_rate - 1)) // 2
    x = _ref_conv(x, params["conv2"], dilation_rate, pad2)
    x = _ref_bn(x, params["bn2"])
    x = _ref_conv(x, params["conv3"], 1, 0)
    return x


# ---------------------------------------------------------------------------
# Deterministic parameter init (PyTorch-like shapes / init scheme)
# ---------------------------------------------------------------------------
def init_params(key, num_in, num_out, kernel_size):
    half = num_out // 2

    def conv_init(k, cout, cin, ks):
        k1, k2 = jax.random.split(k)
        bound = 1.0 / math.sqrt(cin * ks * ks)
        w = jax.random.uniform(k1, (cout, cin, ks, ks), jnp.float32, -bound, bound)
        b = jax.random.uniform(k2, (cout,), jnp.float32, -bound, bound)
        return w, b

    def bn_init(k, c):
        k1, k2, k3 = jax.random.split(k, 3)
        gamma = 1.0 + 0.1 * jax.random.normal(k1, (c,), jnp.float32)
        beta = 0.1 * jax.random.normal(k2, (c,), jnp.float32)
        mean = 0.1 * jax.random.normal(k3, (c,), jnp.float32)
        var = jnp.ones((c,), jnp.float32)
        return gamma, beta, mean, var

    keys = jax.random.split(key, 7)
    params = {
        "bn0": bn_init(keys[0], num_in),
        "conv1": conv_init(keys[1], half, num_in, kernel_size),
        "bn1": bn_init(keys[2], half),
        "conv2": conv_init(keys[3], half, half, kernel_size),
        "bn2": bn_init(keys[4], half),
        "conv3": conv_init(keys[5], num_out, half, 1),
    }
    return params, keys[6]


if __name__ == "__main__":
    key = jax.random.PRNGKey(0)
    num_in, num_out, ksize = 4, 32, 3
    params, key = init_params(key, num_in, num_out, ksize)

    B, H, W = 2, 16, 16
    key, kx = jax.random.split(key)
    x = jax.random.normal(kx, (B, num_in, H, W), jnp.float32)

    for dil in (1, 2):                            # both module branches
        arrays, meta = prepare_block(params, kernel_size=ksize, dilation_rate=dil)
        fwd = jax.jit(functools.partial(conv_block_noact_forward, **meta))
        y = jax.block_until_ready(fwd(x, arrays))
        assert y.shape == (B, num_out, H, W), y.shape

        ref = jax.jit(functools.partial(conv_block_noact_reference,
                                        kernel_size=ksize, dilation_rate=dil))
        y_ref = jax.block_until_ready(ref(x, params))
        err = float(jnp.max(jnp.abs(y - y_ref)))
        scale = float(jnp.max(jnp.abs(y_ref))) + 1e-6
        assert err / scale < 3e-2, (dil, err, scale)

    print("KERNEL_OK")
</pallas_src>

<mosaic_0001>
module attributes {stable_mosaic.version = 11 : i64} {
  func.func @_gemm_affine_kernel(%arg0: i32, %arg1: memref<128x128xbf16, #tpu.memory_space<vmem>>, %arg2: memref<128x128xbf16, #tpu.memory_space<vmem>>, %arg3: memref<1x128xf32, #tpu.memory_space<vmem>>, %arg4: memref<1x128xf32, #tpu.memory_space<vmem>>, %arg5: memref<128x128xbf16, #tpu.memory_space<vmem>>) attributes {dimension_semantics = [#tpu.dimension_semantics<parallel>], iteration_bounds = array<i64: 4>, scalar_prefetch = 0 : i64, scratch_operands = 0 : i64, tpu.core_type = #tpu.core_type<tc>, window_params = [{transform_indices = @transform_0, window_bounds = array<i64: 128, 128>}, {pipeline_mode = #tpu.pipeline_mode<synchronous>, transform_indices = @transform_1, window_bounds = array<i64: 128, 128>}, {pipeline_mode = #tpu.pipeline_mode<synchronous>, transform_indices = @transform_2, window_bounds = array<i64: 1, 128>}, {pipeline_mode = #tpu.pipeline_mode<synchronous>, transform_indices = @transform_3, window_bounds = array<i64: 1, 128>}, {transform_indices = @transform_4, window_bounds = array<i64: 128, 128>}]} {
    %c0 = arith.constant 0 : index
    %c0_0 = arith.constant 0 : index
    %0 = vector.load %arg1[%c0, %c0_0] : memref<128x128xbf16, #tpu.memory_space<vmem>>, vector<128x128xbf16>
    %c0_1 = arith.constant 0 : index
    %c0_2 = arith.constant 0 : index
    %1 = vector.load %arg2[%c0_1, %c0_2] : memref<128x128xbf16, #tpu.memory_space<vmem>>, vector<128x128xbf16>
    %cst = arith.constant dense<0.000000e+00> : vector<128x128xf32>
    %2 = tpu.matmul %0, %1, %cst {dimension_numbers = #tpu.dot_dimension_numbers<[1], [0], [0], [1], [0, 0, 1, 1], [], []>} : vector<128x128xbf16>, vector<128x128xbf16>, vector<128x128xf32> -> vector<128x128xf32>
    %c0_3 = arith.constant 0 : index
    %c0_4 = arith.constant 0 : index
    %3 = vector.load %arg3[%c0_3, %c0_4] : memref<1x128xf32, #tpu.memory_space<vmem>>, vector<1x128xf32>
    %4 = vector.broadcast %3 : vector<1x128xf32> to vector<128x128xf32>
    %5 = arith.mulf %2, %4 : vector<128x128xf32>
    %c0_5 = arith.constant 0 : index
    %c0_6 = arith.constant 0 : index
    %6 = vector.load %arg4[%c0_5, %c0_6] : memref<1x128xf32, #tpu.memory_space<vmem>>, vector<1x128xf32>
    %7 = vector.broadcast %6 : vector<1x128xf32> to vector<128x128xf32>
    %8 = arith.addf %5, %7 : vector<128x128xf32>
    %9 = arith.truncf %8 : vector<128x128xf32> to vector<128x128xbf16>
    %c0_7 = arith.constant 0 : index
    %c0_8 = arith.constant 0 : index
    %10 = vector.load %arg5[%c0_7, %c0_8] : memref<128x128xbf16, #tpu.memory_space<vmem>>, vector<128x128xbf16>
    tpu.vector_store %arg5[%c0_7, %c0_8], %9 {strides = array<i32>} : memref<128x128xbf16, #tpu.memory_space<vmem>>, vector<128x128xbf16>,
    return
  }
  func.func @transform_0(%arg0: i32) -> (i32, i32) {
    %c0_i32 = arith.constant 0 : i32
    %c0_i32_0 = arith.constant 0 : i32
    return %arg0, %c0_i32 : i32, i32
  }
  func.func @transform_1(%arg0: i32) -> (i32, i32) {
    %c0_i32 = arith.constant 0 : i32
    %c0_i32_0 = arith.constant 0 : i32
    %c0_i32_1 = arith.constant 0 : i32
    return %c0_i32, %c0_i32_0 : i32, i32
  }
  func.func @transform_2(%arg0: i32) -> (i32, i32) {
    %c0_i32 = arith.constant 0 : i32
    %c0_i32_0 = arith.constant 0 : i32
    %c0_i32_1 = arith.constant 0 : i32
    return %c0_i32, %c0_i32_0 : i32, i32
  }
  func.func @transform_3(%arg0: i32) -> (i32, i32) {
    %c0_i32 = arith.constant 0 : i32
    %c0_i32_0 = arith.constant 0 : i32
    %c0_i32_1 = arith.constant 0 : i32
    return %c0_i32, %c0_i32_0 : i32, i32
  }
  func.func @transform_4(%arg0: i32) -> (i32, i32) {
    %c0_i32 = arith.constant 0 : i32
    %c0_i32_0 = arith.constant 0 : i32
    return %arg0, %c0_i32 : i32, i32
  }
}

module attributes {stable_mosaic.version = 11 : i64} {
  func.func @_gemm_fused1x1_kernel(%arg0: i32, %arg1: memref<128x256xbf16, #tpu.memory_space<vmem>>, %arg2: memref<256x128xbf16, #tpu.memory_space<vmem>>, %arg3: memref<128x128xbf16, #tpu.memory_space<vmem>>, %arg4: memref<1x128xf32, #tpu.memory_space<vmem>>, %arg5: memref<128x128xf32, #tpu.memory_space<vmem>>) attributes {dimension_semantics = [#tpu.dimension_semantics<parallel>], iteration_bounds = array<i64: 4>, scalar_prefetch = 0 : i64, scratch_operands = 0 : i64, tpu.core_type = #tpu.core_type<tc>, window_params = [{transform_indices = @transform_0, window_bounds = array<i64: 128, 256>}, {pipeline_mode = #tpu.pipeline_mode<synchronous>, transform_indices = @transform_1, window_bounds = array<i64: 256, 128>}, {pipeline_mode = #tpu.pipeline_mode<synchronous>, transform_indices = @transform_2, window_bounds = array<i64: 128, 128>}, {pipeline_mode = #tpu.pipeline_mode<synchronous>, transform_indices = @transform_3, window_bounds = array<i64: 1, 128>}, {transform_indices = @transform_4, window_bounds = array<i64: 128, 128>}]} {
    %c0 = arith.constant 0 : index
    %c0_0 = arith.constant 0 : index
    %0 = vector.load %arg1[%c0, %c0_0] : memref<128x256xbf16, #tpu.memory_space<vmem>>, vector<128x256xbf16>
    %c0_1 = arith.constant 0 : index
    %c0_2 = arith.constant 0 : index
    %1 = vector.load %arg2[%c0_1, %c0_2] : memref<256x128xbf16, #tpu.memory_space<vmem>>, vector<256x128xbf16>
    %cst = arith.constant dense<0.000000e+00> : vector<128x128xf32>
    %2 = tpu.matmul %0, %1, %cst {dimension_numbers = #tpu.dot_dimension_numbers<[1], [0], [0], [1], [0, 0, 1, 1], [], []>} : vector<128x256xbf16>, vector<256x128xbf16>, vector<128x128xf32> -> vector<128x128xf32>
    %3 = arith.truncf %2 : vector<128x128xf32> to vector<128x128xbf16>
    %c0_3 = arith.constant 0 : index
    %c0_4 = arith.constant 0 : index
    %4 = vector.load %arg3[%c0_3, %c0_4] : memref<128x128xbf16, #tpu.memory_space<vmem>>, vector<128x128xbf16>
    %cst_5 = arith.constant dense<0.000000e+00> : vector<128x128xf32>
    %5 = tpu.matmul %3, %4, %cst_5 {dimension_numbers = #tpu.dot_dimension_numbers<[1], [0], [0], [1], [0, 0, 1, 1], [], []>} : vector<128x128xbf16>, vector<128x128xbf16>, vector<128x128xf32> -> vector<128x128xf32>
    %c0_6 = arith.constant 0 : index
    %c0_7 = arith.constant 0 : index
    %6 = vector.load %arg4[%c0_6, %c0_7] : memref<1x128xf32, #tpu.memory_space<vmem>>, vector<1x128xf32>
    %7 = vector.broadcast %6 : vector<1x128xf32> to vector<128x128xf32>
    %8 = arith.addf %5, %7 : vector<128x128xf32>
    %c0_8 = arith.constant 0 : index
    %c0_9 = arith.constant 0 : index
    %9 = vector.load %arg5[%c0_8, %c0_9] : memref<128x128xf32, #tpu.memory_space<vmem>>, vector<128x128xf32>
    tpu.vector_store %arg5[%c0_8, %c0_9], %8 {strides = array<i32>} : memref<128x128xf32, #tpu.memory_space<vmem>>, vector<128x128xf32>,
    return
  }
  func.func @transform_0(%arg0: i32) -> (i32, i32) {
    %c0_i32 = arith.constant 0 : i32
    %c0_i32_0 = arith.constant 0 : i32
    return %arg0, %c0_i32 : i32, i32
  }
  func.func @transform_1(%arg0: i32) -> (i32, i32) {
    %c0_i32 = arith.constant 0 : i32
    %c0_i32_0 = arith.constant 0 : i32
    %c0_i32_1 = arith.constant 0 : i32
    return %c0_i32, %c0_i32_0 : i32, i32
  }
  func.func @transform_2(%arg0: i32) -> (i32, i32) {
    %c0_i32 = arith.constant 0 : i32
    %c0_i32_0 = arith.constant 0 : i32
    %c0_i32_1 = arith.constant 0 : i32
    return %c0_i32, %c0_i32_0 : i32, i32
  }
  func.func @transform_3(%arg0: i32) -> (i32, i32) {
    %c0_i32 = arith.constant 0 : i32
    %c0_i32_0 = arith.constant 0 : i32
    %c0_i32_1 = arith.constant 0 : i32
    return %c0_i32, %c0_i32_0 : i32, i32
  }
  func.func @transform_4(%arg0: i32) -> (i32, i32) {
    %c0_i32 = arith.constant 0 : i32
    %c0_i32_0 = arith.constant 0 : i32
    return %arg0, %c0_i32 : i32, i32
  }
}

</mosaic_0001>

<llo_original>
// kernel: conv_block_noact_forward.2
$region0: #{conv_block_noact_forward.2}
  #allocation0 [shape = 'u32[]', space=smem, size = 0x4, offset = 0x4, fixed_abs, tag = 'smem constant byte address 0x4 - core index']
  #allocation1 [shape = 'u32[144,128]{1,0:T(1,128)}', space=vmem, size = 0x12000, scoped, tag = 'internal scratch']
  %s0 = inlined_call_operand.vmem [shape: bf16[512,128], index: 0, kind: input, shape index: {}]
  %s1 = inlined_call_operand.vmem [shape: bf16[128,128], index: 1, kind: input, shape index: {}]
  %s2 = inlined_call_operand.vmem [shape: f32[1,128], index: 2, kind: input, shape index: {}]
  %s3 = inlined_call_operand.vmem [shape: f32[1,128], index: 3, kind: input, shape index: {}]
  %s4 = inlined_call_operand.vmem [shape: bf16[512,128], index: 4, kind: output, shape index: {}]
  %s5 = sld [smem:[#allocation0]]
  $region49: #{conv_block_noact_forward.2} parent=0
    _
  %s7 = ssub.s32 1, %s5
  %s8 = scalar_select 0, %s7, %s5
  loop: start=0, step=1, limit=6
  $region2: #{conv_block_noact_forward.2} parent=0 // loop_pre_header
    _
  $region3: #{conv_block_noact_forward.2} parent=0 // loop_header
    %s10 = sphi 0, %s14
    %p11 = scmp.ge.s32.totalorder %s10, 6
    %s20 = sphi 0, %s22
    %s23 = sphi 0, %s20
    %s24 = sphi 0, %s23
    %s40 = sphi 0, %s24
    %s44 = sphi 0, %s44
    %s46 = sphi 0, %s44
    %s47 = sphi 0, %s46
    %s61 = sphi 0, %s47
    %s65 = sphi 0, %s65
    %s67 = sphi 0, %s65
    %s68 = sphi 0, %s67
    %s82 = sphi 0, %s68
    %s86 = sphi 0, %s86
    %s88 = sphi 0, %s86
    %s89 = sphi 0, %s88
    %s103 = sphi 0, %s89
    %s109 = sphi 0, %s111
    %s112 = sphi 0, %s109
    %s113 = sphi 0, %s112
    %s129 = sphi 0, %s113
  $region4: #{conv_block_noact_forward.2} parent=0 // loop_header_branch
    %13 = sbr.rel (%p11) target = $region8
  $region5: #{conv_block_noact_forward.2} parent=0 // loop_body
    %s15 = ssub.s32 %s10, 1
    %s16 = ssub.s32 %s10, 2
    %s17 = sadd.s32 %s10, 1
    %s18 = ssub.s32 %s10, %s17
    %p19 = scmp.eq.s32.totalorder %s18, 0
    %s21 = sadd.s32 %s20, 1
    %s22 = scalar_select %p19, %s20, %s21
    %p25 = pneg %p19
    %p26 = scmp.eq.s32.totalorder %s10, 3
    %p27 = por %p25, %p26
    %p28 = scmp.ne.s32.totalorder %s20, %s23
    %p29 = scmp.eq.s32.totalorder %s10, 0
    %p30 = por %p28, %p29
    %p31 = scmp.ne.s32.totalorder %s20, %s23
    %p32 = scmp.eq.s32.totalorder %s15, 3
    %p33 = por %p31, %p32
    %p34 = scmp.ne.s32.totalorder %s23, %s24
    %p35 = scmp.eq.s32.totalorder %s15, 0
    %p36 = por %p34, %p35
    %p37 = scmp.ne.s32.totalorder %s23, %s24
    %p38 = scmp.eq.s32.totalorder %s16, 3
    %p39 = por %p37, %p38
    %p41 = scmp.ne.s32.totalorder %s24, %s40
    %p42 = scmp.eq.s32.totalorder %s16, 0
    %p43 = por %p41, %p42
    %s45 = sadd.s32 %s44, 1
    %p48 = scmp.eq.s32.totalorder %s10, 3
    %p49 = scmp.ne.s32.totalorder %s44, %s46
    %p50 = scmp.eq.s32.totalorder %s10, 0
    %p51 = por %p49, %p50
    %p52 = scmp.ne.s32.totalorder %s44, %s46
    %p53 = scmp.eq.s32.totalorder %s15, 3
    %p54 = por %p52, %p53
    %p55 = scmp.ne.s32.totalorder %s46, %s47
    %p56 = scmp.eq.s32.totalorder %s15, 0
    %p57 = por %p55, %p56
    %p58 = scmp.ne.s32.totalorder %s46, %s47
    %p59 = scmp.eq.s32.totalorder %s16, 3
    %p60 = por %p58, %p59
    %p62 = scmp.ne.s32.totalorder %s47, %s61
    %p63 = scmp.eq.s32.totalorder %s16, 0
    %p64 = por %p62, %p63
    %s66 = sadd.s32 %s65, 1
    %p69 = scmp.eq.s32.totalorder %s10, 3
    %p70 = scmp.ne.s32.totalorder %s65, %s67
    %p71 = scmp.eq.s32.totalorder %s10, 0
    %p72 = por %p70, %p71
    %p73 = scmp.ne.s32.totalorder %s65, %s67
    %p74 = scmp.eq.s32.totalorder %s15, 3
    %p75 = por %p73, %p74
    %p76 = scmp.ne.s32.totalorder %s67, %s68
    %p77 = scmp.eq.s32.totalorder %s15, 0
    %p78 = por %p76, %p77
    %p79 = scmp.ne.s32.totalorder %s67, %s68
    %p80 = scmp.eq.s32.totalorder %s16, 3
    %p81 = por %p79, %p80
    %p83 = scmp.ne.s32.totalorder %s68, %s82
    %p84 = scmp.eq.s32.totalorder %s16, 0
    %p85 = por %p83, %p84
    %s87 = sadd.s32 %s86, 1
    %p90 = scmp.eq.s32.totalorder %s10, 3
    %p91 = scmp.ne.s32.totalorder %s86, %s88
    %p92 = scmp.eq.s32.totalorder %s10, 0
    %p93 = por %p91, %p92
    %p94 = scmp.ne.s32.totalorder %s86, %s88
    %p95 = scmp.eq.s32.totalorder %s15, 3
    %p96 = por %p94, %p95
    %p97 = scmp.ne.s32.totalorder %s88, %s89
    %p98 = scmp.eq.s32.totalorder %s15, 0
    %p99 = por %p97, %p98
    %p100 = scmp.ne.s32.totalorder %s88, %s89
    %p101 = scmp.eq.s32.totalorder %s16, 3
    %p102 = por %p100, %p101
    %p104 = scmp.ne.s32.totalorder %s89, %s103
    %p105 = scmp.eq.s32.totalorder %s16, 0
    %p106 = por %p104, %p105
    %s107 = ssub.s32 %s10, %s17
    %p108 = scmp.eq.s32.totalorder %s107, 0
    %s110 = sadd.s32 %s109, 1
    %s111 = scalar_select %p108, %s109, %s110
    %p114 = pneg %p108
    %p115 = scmp.eq.s32.totalorder %s10, 3
    %p116 = por %p114, %p115
    %p117 = scmp.ne.s32.totalorder %s109, %s112
    %p118 = scmp.eq.s32.totalorder %s10, 0
    %p119 = por %p117, %p118
    %p120 = scmp.ne.s32.totalorder %s109, %s112
    %p121 = scmp.eq.s32.totalorder %s15, 3
    %p122 = por %p120, %p121
    %p123 = scmp.ne.s32.totalorder %s112, %s113
    %p124 = scmp.eq.s32.totalorder %s15, 0
    %p125 = por %p123, %p124
    %p126 = scmp.ne.s32.totalorder %s112, %s113
    %p127 = scmp.eq.s32.totalorder %s16, 3
    %p128 = por %p126, %p127
    %p130 = scmp.ne.s32.totalorder %s113, %s129
    %p131 = scmp.eq.s32.totalorder %s16, 0
    %p132 = por %p130, %p131
    %p133 = scmp.le.s32.totalorder 1, %s10
    %p134 = scmp.lt.s32.totalorder %s10, 5
    %p135 = pnand %p133, %p134
    %p136 = pneg %p135
    // Predicated region
    $region9: #{conv_block_noact_forward.2} parent=5 // pred_check
      _
    $region10: #{conv_block_noact_forward.2} parent=5 // pred_check_branch
      %138 = sbr.rel (%p135) target = $region12
    $region11: #{conv_block_noact_forward.2} parent=5 // pred_region
      %s139 = ssub.s32 %s10, 1
      // Predicated region
      $region13: #{conv_block_noact_forward.2} parent=11 // pred_check
        %p140 = pneg %p57
      $region14: #{conv_block_noact_forward.2} parent=11 // pred_check_branch
        %142 = sbr.rel (%p140) target = $region16
      $region15: #{conv_block_noact_forward.2} parent=11 // pred_region
        _
      $region16: #{conv_block_noact_forward.2} parent=11 // pred_fallthru
        _
      // Predicated region
      $region17: #{conv_block_noact_forward.2} parent=11 // pred_check
        %p143 = pneg %p78
      $region18: #{conv_block_noact_forward.2} parent=11 // pred_check_branch
        %145 = sbr.rel (%p143) target = $region20
      $region19: #{conv_block_noact_forward.2} parent=11 // pred_region
        _
      $region20: #{conv_block_noact_forward.2} parent=11 // pred_fallthru
        _
      // Predicated region
      $region21: #{conv_block_noact_forward.2} parent=11 // pred_check
        %p146 = pneg %p99
      $region22: #{conv_block_noact_forward.2} parent=11 // pred_check_branch
        %148 = sbr.rel (%p146) target = $region24
      $region23: #{conv_block_noact_forward.2} parent=11 // pred_region
        _
      $region24: #{conv_block_noact_forward.2} parent=11 // pred_fallthru
        _
    $region12: #{conv_block_noact_forward.2} parent=5 // pred_fallthru
      _
    %p149 = scmp.lt.s32.totalorder %s10, 4
    // Predicated region
    $region25: #{conv_block_noact_forward.2} parent=5 // pred_check
      %p150 = pneg %p149
    $region26: #{conv_block_noact_forward.2} parent=5 // pred_check_branch
      %152 = sbr.rel (%p150) target = $region28
    $region27: #{conv_block_noact_forward.2} parent=5 // pred_region
      // Predicated region
      $region29: #{conv_block_noact_forward.2} parent=27 // pred_check
        %p153 = pneg %p30
      $region30: #{conv_block_noact_forward.2} parent=27 // pred_check_branch
        %155 = sbr.rel (%p153) target = $region32
      $region31: #{conv_block_noact_forward.2} parent=27 // pred_region
        %s156 = smul.u32 16, %s10
        %p157 = scmp.lt.s32.totalorder %s156, 63
        %s158 = scalar_select %p157, %s156, 63
        %s159 = smul.addr %s158, 4
        %s160 = scalar_lea.vmem %s0, %s159
        %s161 = smul.u32 16, %s10
      $region32: #{conv_block_noact_forward.2} parent=27 // pred_fallthru
        _
    $region28: #{conv_block_noact_forward.2} parent=5 // pred_fallthru
      _
    %p162 = scmp.le.s32.totalorder 1, %s10
    %p163 = scmp.lt.s32.totalorder %s10, 5
    %p164 = pnand %p162, %p163
    %p165 = pneg %p164
    // Predicated region
    $region33: #{conv_block_noact_forward.2} parent=5 // pred_check
      _
    $region34: #{conv_block_noact_forward.2} parent=5 // pred_check_branch
      %167 = sbr.rel (%p164) target = $region36
    $region35: #{conv_block_noact_forward.2} parent=5 // pred_region
      %s168 = ssub.s32 %s10, 1
      %s169 = smul.u32 16, %s15
      %p170 = scmp.lt.s32.totalorder %s169, 63
      %s171 = scalar_select %p170, %s169, 63
      %s172 = smul.addr %s171, 4
      %s173 = scalar_lea.vmem %s0, %s172
      %p174 = pneg %p36
      %p175 = pneg %p33
      %p176 = pneg %p57
      %p177 = pneg %p54
      %p178 = pneg %p78
      %p179 = pneg %p75
      %p180 = pneg %p99
      %p181 = pneg %p96
      %p182 = pneg %p125
      %p183 = pneg %p122
      %s184 = smul.u32 16, %s15
      %p185 = scmp.lt.s32.totalorder %s184, 63
      %s186 = scalar_select %p185, %s184, 63
      %s187 = smul.addr %s186, 4
      %s188 = scalar_lea.vmem %s4, %s187
      %s189 = smul.u32 16, %s15
      %p190 = scmp.lt.s32.totalorder %s189, 63
      %s191 = scalar_select %p190, %s189, 63
      %s192 = smul.addr %s191, 4
      %s193 = scalar_lea.vmem %s0, %s192
      %s194 = smul.u32 16, %s15
      %s195 = smul.u32 16, %s15
      %p196 = scmp.lt.s32.totalorder %s195, 63
      %s197 = scalar_select %p196, %s195, 63
      %s198 = smul.addr %s197, 4
      %s199 = scalar_lea.vmem %s4, %s198
      %s200 = smul.u32 16, %s15
      %v202 = vld [vmem:[%s193] sm:$0xf]
      %v203 = vld [vmem:[%s193 + $0x4] sm:$0xf]
      %v204 = vld [vmem:[%s193 + $0x8] sm:$0xf]
      %v205 = vld [vmem:[%s193 + $0xc] sm:$0xf]
      %v206 = vld [vmem:[%s193 + $0x10] sm:$0xf]
      %v207 = vld [vmem:[%s193 + $0x14] sm:$0xf]
      %v208 = vld [vmem:[%s193 + $0x18] sm:$0xf]
      %v209 = vld [vmem:[%s193 + $0x1c] sm:$0xf]
      %v210 = vld [vmem:[%s193 + $0x20] sm:$0xf]
      %v211 = vld [vmem:[%s193 + $0x24] sm:$0xf]
      %v212 = vld [vmem:[%s193 + $0x28] sm:$0xf]
      %v213 = vld [vmem:[%s193 + $0x2c] sm:$0xf]
      %v214 = vld [vmem:[%s193 + $0x30] sm:$0xf]
      %v215 = vld [vmem:[%s193 + $0x34] sm:$0xf]
      %v216 = vld [vmem:[%s193 + $0x38] sm:$0xf]
      %v217 = vld [vmem:[%s193 + $0x3c] sm:$0xf]
      %v218 = vld [vmem:[%s1] sm:$0xf]
      %v219 = vld [vmem:[%s1 + $0x4] sm:$0xf]
      %v220 = vld [vmem:[%s1 + $0x8] sm:$0xf]
      %v221 = vld [vmem:[%s1 + $0xc] sm:$0xf]
      %v222 = vld [vmem:[%s1 + $0x10] sm:$0xf]
      %v223 = vld [vmem:[%s1 + $0x14] sm:$0xf]
      %v224 = vld [vmem:[%s1 + $0x18] sm:$0xf]
      %v225 = vld [vmem:[%s1 + $0x1c] sm:$0xf]
      %v226 = vld [vmem:[%s1 + $0x20] sm:$0xf]
      %v227 = vld [vmem:[%s1 + $0x24] sm:$0xf]
      %v228 = vld [vmem:[%s1 + $0x28] sm:$0xf]
      %v229 = vld [vmem:[%s1 + $0x2c] sm:$0xf]
      %v230 = vld [vmem:[%s1 + $0x30] sm:$0xf]
      %v231 = vld [vmem:[%s1 + $0x34] sm:$0xf]
      %v232 = vld [vmem:[%s1 + $0x38] sm:$0xf]
      %v233 = vld [vmem:[%s1 + $0x3c] sm:$0xf]
      %v250 = vunpack.c.l.b16 %v202
      %v251 = vunpack.c.l.b16 %v203
      %v252 = vunpack.c.l.b16 %v204
      %v253 = vunpack.c.l.b16 %v205
      %v254 = vunpack.c.l.b16 %v206
      %v255 = vunpack.c.l.b16 %v207
      %v256 = vunpack.c.l.b16 %v208
      %v257 = vunpack.c.l.b16 %v209
      %v258 = vunpack.c.l.b16 %v210
      %v259 = vunpack.c.l.b16 %v211
      %v260 = vunpack.c.l.b16 %v212
      %v261 = vunpack.c.l.b16 %v213
      %v262 = vunpack.c.l.b16 %v214
      %v263 = vunpack.c.l.b16 %v215
      %v264 = vunpack.c.l.b16 %v216
      %v265 = vunpack.c.l.b16 %v217
      %v266 = vpack.c.b16 %v251, %v250
      %v267 = vpack.c.b16 %v253, %v252
      %v268 = vpack.c.b16 %v255, %v254
      %v269 = vpack.c.b16 %v257, %v256
      %v270 = vpack.c.b16 %v259, %v258
      %v271 = vpack.c.b16 %v261, %v260
      %v272 = vpack.c.b16 %v263, %v262
      %v273 = vpack.c.b16 %v265, %v264
      %v298 = vunpack.c.l.b16 %v218
      %v299 = vunpack.c.l.b16 %v219
      %v300 = vunpack.c.l.b16 %v220
      %v301 = vunpack.c.l.b16 %v221
      %v302 = vunpack.c.l.b16 %v222
      %v303 = vunpack.c.l.b16 %v223
      %v304 = vunpack.c.l.b16 %v224
      %v305 = vunpack.c.l.b16 %v225
      %v306 = vunpack.c.l.b16 %v226
      %v307 = vunpack.c.l.b16 %v227
      %v308 = vunpack.c.l.b16 %v228
      %v309 = vunpack.c.l.b16 %v229
      %v310 = vunpack.c.l.b16 %v230
      %v311 = vunpack.c.l.b16 %v231
      %v312 = vunpack.c.l.b16 %v232
      %v313 = vunpack.c.l.b16 %v233
      %v314 = vpack.c.b16 %v299, %v298
      %v315 = vpack.c.b16 %v301, %v300
      %v316 = vpack.c.b16 %v303, %v302
      %v317 = vpack.c.b16 %v305, %v304
      %v318 = vpack.c.b16 %v307, %v306
      %v319 = vpack.c.b16 %v309, %v308
      %v320 = vpack.c.b16 %v311, %v310
      %v321 = vpack.c.b16 %v313, %v312
      %330 = vmatprep.subr.bf16.mxu0 0
      %331 = vmatpush1.bf16.msra.mxu0 %v314
      %332 = vmatprep.subr.bf16.mxu0 0
      %333 = vmatpush1.bf16.msra.mxu0 %v315
      %334 = vmatprep.subr.bf16.mxu0 0
      %335 = vmatpush1.bf16.msra.mxu0 %v316
      %336 = vmatprep.subr.bf16.mxu0 0
      %337 = vmatpush1.bf16.msra.mxu0 %v317
      %338 = vmatprep.subr.bf16.mxu0 0
      %339 = vmatpush1.bf16.msra.mxu0 %v318
      %340 = vmatprep.subr.bf16.mxu0 0
      %341 = vmatpush1.bf16.msra.mxu0 %v319
      %342 = vmatprep.subr.bf16.mxu0 0
      %343 = vmatpush1.bf16.msra.mxu0 %v320
      %344 = vmatprep.subr.bf16.mxu0 0
      %345 = vmatpush1.bf16.msra.mxu0 %v321
      %346 = vmatprep.subr.bf16.mxu0 0
      %347 = vmatpush1.bf16.msra.mxu0 0
      %348 = vmatprep.subr.bf16.mxu0 0
      %349 = vmatpush1.bf16.msra.mxu0 0
      %350 = vmatprep.subr.bf16.mxu0 0
      %351 = vmatpush1.bf16.msra.mxu0 0
      %352 = vmatprep.subr.bf16.mxu0 0
      %353 = vmatpush1.bf16.msra.mxu0 0
      %354 = vmatprep.subr.bf16.mxu0 0
      %355 = vmatpush1.bf16.msra.mxu0 0
      %356 = vmatprep.subr.bf16.mxu0 0
      %357 = vmatpush1.bf16.msra.mxu0 0
      %358 = vmatprep.subr.bf16.mxu0 0
      %359 = vmatpush1.bf16.msra.mxu0 0
      %360 = vmatprep.subr.bf16.mxu0 0
      %361 = vmatpush1.bf16.msra.mxu0 0
      %362 = vmatprep.mubr.bf16.mxu0 0
      %363 = vmatmul.mubr.bf16.gmra.mrb[0].mxu0 %v266
      %v364 = vpop.f32.mrb[0].mxu0
      %v365 = vadd.f32 0.0, %v364
      %v366 = vpop.f32.mrb[0].mxu0
      %v367 = vpop.f32.mrb[0].mxu0
      %v368 = vadd.f32 0.0, %v367
      %v369 = vpop.f32.mrb[0].mxu0
      %370 = vmatprep.mubr.bf16.mxu0 0
      %371 = vmatmul.mubr.bf16.gmra.mrb[0].mxu0 %v267
      %v372 = vpop.f32.mrb[0].mxu0
      %v373 = vadd.f32 0.0, %v372
      %v374 = vpop.f32.mrb[0].mxu0
      %v375 = vpop.f32.mrb[0].mxu0
      %v376 = vadd.f32 0.0, %v375
      %v377 = vpop.f32.mrb[0].mxu0
      %378 = vmatprep.mubr.bf16.mxu0 0
      %379 = vmatmul.mubr.bf16.gmra.mrb[0].mxu0 %v268
      %v380 = vpop.f32.mrb[0].mxu0
      %v381 = vadd.f32 0.0, %v380
      %v382 = vpop.f32.mrb[0].mxu0
      %v383 = vpop.f32.mrb[0].mxu0
      %v384 = vadd.f32 0.0, %v383
      %v385 = vpop.f32.mrb[0].mxu0
      %386 = vmatprep.mubr.bf16.mxu0 0
      %387 = vmatmul.mubr.bf16.gmra.mrb[0].mxu0 %v269
      %v388 = vpop.f32.mrb[0].mxu0
      %v389 = vadd.f32 0.0, %v388
      %v390 = vpop.f32.mrb[0].mxu0
      %v391 = vpop.f32.mrb[0].mxu0
      %v392 = vadd.f32 0.0, %v391
      %v393 = vpop.f32.mrb[0].mxu0
      %394 = vmatprep.mubr.bf16.mxu0 0
      %395 = vmatmul.mubr.bf16.gmra.mrb[0].mxu0 %v270
      %v396 = vpop.f32.mrb[0].mxu0
      %v397 = vadd.f32 0.0, %v396
      %v398 = vpop.f32.mrb[0].mxu0
      %v399 = vpop.f32.mrb[0].mxu0
      %v400 = vadd.f32 0.0, %v399
      %v401 = vpop.f32.mrb[0].mxu0
      %402 = vmatprep.mubr.bf16.mxu0 0
      %403 = vmatmul.mubr.bf16.gmra.mrb[0].mxu0 %v271
      %v404 = vpop.f32.mrb[0].mxu0
      %v405 = vadd.f32 0.0, %v404
      %v406 = vpop.f32.mrb[0].mxu0
      %v407 = vpop.f32.mrb[0].mxu0
      %v408 = vadd.f32 0.0, %v407
      %v409 = vpop.f32.mrb[0].mxu0
      %410 = vmatprep.mubr.bf16.mxu0 0
      %411 = vmatmul.mubr.bf16.gmra.mrb[0].mxu0 %v272
      %v412 = vpop.f32.mrb[0].mxu0
      %v413 = vadd.f32 0.0, %v412
      %v414 = vpop.f32.mrb[0].mxu0
      %v415 = vpop.f32.mrb[0].mxu0
      %v416 = vadd.f32 0.0, %v415
      %v417 = vpop.f32.mrb[0].mxu0
      %418 = vmatprep.mubr.bf16.mxu0 0
      %419 = vmatmul.mubr.bf16.gmra.mrb[0].mxu0 %v273
      %v420 = vpop.f32.mrb[0].mxu0
      %v421 = vadd.f32 0.0, %v420
      %v422 = vpop.f32.mrb[0].mxu0
      %v423 = vpop.f32.mrb[0].mxu0
      %v424 = vadd.f32 0.0, %v423
      %v425 = vpop.f32.mrb[0].mxu0
      %426 = vdwg.mxu0
      %v427 = vld [vmem:[%s2] sm:$0x1]
      %v429 = vlaneseq
      %v430 = vshrl.u32 %v429, 7
      %v431 = vsub.s32 0, %v430
      %v432 = vrot.slane %v427, %v431
      %v434 = vmul.f32 %v365, %v432
      %v435 = vmul.f32 %v368, %v432
      %v436 = vmul.f32 %v373, %v432
      %v437 = vmul.f32 %v376, %v432
      %v438 = vmul.f32 %v381, %v432
      %v439 = vmul.f32 %v384, %v432
      %v440 = vmul.f32 %v389, %v432
      %v441 = vmul.f32 %v392, %v432
      %v442 = vmul.f32 %v397, %v432
      %v443 = vmul.f32 %v400, %v432
      %v444 = vmul.f32 %v405, %v432
      %v445 = vmul.f32 %v408, %v432
      %v446 = vmul.f32 %v413, %v432
      %v447 = vmul.f32 %v416, %v432
      %v448 = vmul.f32 %v421, %v432
      %v449 = vmul.f32 %v424, %v432
      %v450 = vld [vmem:[%s3] sm:$0x1]
      %v452 = vlaneseq
      %v453 = vshrl.u32 %v452, 7
      %v454 = vsub.s32 0, %v453
      %v455 = vrot.slane %v450, %v454
      %v457 = vadd.f32 %v434, %v455
      %v458 = vadd.f32 %v435, %v455
      %v459 = vadd.f32 %v436, %v455
      %v460 = vadd.f32 %v437, %v455
      %v461 = vadd.f32 %v438, %v455
      %v462 = vadd.f32 %v439, %v455
      %v463 = vadd.f32 %v440, %v455
      %v464 = vadd.f32 %v441, %v455
      %v465 = vadd.f32 %v442, %v455
      %v466 = vadd.f32 %v443, %v455
      %v467 = vadd.f32 %v444, %v455
      %v468 = vadd.f32 %v445, %v455
      %v469 = vadd.f32 %v446, %v455
      %v470 = vadd.f32 %v447, %v455
      %v471 = vadd.f32 %v448, %v455
      %v472 = vadd.f32 %v449, %v455
      %v473 = vpack.c.bf16 %v458, %v457
      %v474 = vpack.c.bf16 %v460, %v459
      %v475 = vpack.c.bf16 %v462, %v461
      %v476 = vpack.c.bf16 %v464, %v463
      %v477 = vpack.c.bf16 %v466, %v465
      %v478 = vpack.c.bf16 %v468, %v467
      %v479 = vpack.c.bf16 %v470, %v469
      %v480 = vpack.c.bf16 %v472, %v471
      %v489 = vunpack.c.l.b16 %v473
      %v490 = vunpack.c.h.b16 %v473
      %v491 = vunpack.c.l.b16 %v474
      %v492 = vunpack.c.h.b16 %v474
      %v493 = vunpack.c.l.b16 %v475
      %v494 = vunpack.c.h.b16 %v475
      %v495 = vunpack.c.l.b16 %v476
      %v496 = vunpack.c.h.b16 %v476
      %v497 = vunpack.c.l.b16 %v477
      %v498 = vunpack.c.h.b16 %v477
      %v499 = vunpack.c.l.b16 %v478
      %v500 = vunpack.c.h.b16 %v478
      %v501 = vunpack.c.l.b16 %v479
      %v502 = vunpack.c.h.b16 %v479
      %v503 = vunpack.c.l.b16 %v480
      %v504 = vunpack.c.h.b16 %v480
      %v505 = vpack.c.b16 %v489, %v489
      %v506 = vpack.c.b16 %v490, %v490
      %v507 = vpack.c.b16 %v491, %v491
      %v508 = vpack.c.b16 %v492, %v492
      %v509 = vpack.c.b16 %v493, %v493
      %v510 = vpack.c.b16 %v494, %v494
      %v511 = vpack.c.b16 %v495, %v495
      %v512 = vpack.c.b16 %v496, %v496
      %v513 = vpack.c.b16 %v497, %v497
      %v514 = vpack.c.b16 %v498, %v498
      %v515 = vpack.c.b16 %v499, %v499
      %v516 = vpack.c.b16 %v500, %v500
      %v517 = vpack.c.b16 %v501, %v501
      %v518 = vpack.c.b16 %v502, %v502
      %v519 = vpack.c.b16 %v503, %v503
      %v520 = vpack.c.b16 %v504, %v504
      %537 = vst [vmem:[%s199] sm:$0xf] %v505
      %538 = vst [vmem:[%s199 + $0x4] sm:$0xf] %v506
      %539 = vst [vmem:[%s199 + $0x8] sm:$0xf] %v507
      %540 = vst [vmem:[%s199 + $0xc] sm:$0xf] %v508
      %541 = vst [vmem:[%s199 + $0x10] sm:$0xf] %v509
      %542 = vst [vmem:[%s199 + $0x14] sm:$0xf] %v510
      %543 = vst [vmem:[%s199 + $0x18] sm:$0xf] %v511
      %544 = vst [vmem:[%s199 + $0x1c] sm:$0xf] %v512
      %545 = vst [vmem:[%s199 + $0x20] sm:$0xf] %v513
      %546 = vst [vmem:[%s199 + $0x24] sm:$0xf] %v514
      %547 = vst [vmem:[%s199 + $0x28] sm:$0xf] %v515
      %548 = vst [vmem:[%s199 + $0x2c] sm:$0xf] %v516
      %549 = vst [vmem:[%s199 + $0x30] sm:$0xf] %v517
      %550 = vst [vmem:[%s199 + $0x34] sm:$0xf] %v518
      %551 = vst [vmem:[%s199 + $0x38] sm:$0xf] %v519
      %552 = vst [vmem:[%s199 + $0x3c] sm:$0xf] %v520
      %s553 = smul.u32 16, %s15
      %p554 = scmp.lt.s32.totalorder %s553, 63
      %s555 = scalar_select %p554, %s553, 63
      %s556 = smul.addr %s555, 4
      %s557 = scalar_lea.vmem %s4, %s556
      // Predicated region
      $region37: #{conv_block_noact_forward.2} parent=35 // pred_check
        %p558 = pneg %p122
      $region38: #{conv_block_noact_forward.2} parent=35 // pred_check_branch
        %560 = sbr.rel (%p558) target = $region40
      $region39: #{conv_block_noact_forward.2} parent=35 // pred_region
        %s561 = smul.u32 16, %s15
      $region40: #{conv_block_noact_forward.2} parent=35 // pred_fallthru
        _
    $region36: #{conv_block_noact_forward.2} parent=5 // pred_fallthru
      _
    %p562 = scmp.le.s32.totalorder 2, %s10
    // Predicated region
    $region41: #{conv_block_noact_forward.2} parent=5 // pred_check
      %p563 = pneg %p562
    $region42: #{conv_block_noact_forward.2} parent=5 // pred_check_branch
      %565 = sbr.rel (%p563) target = $region44
    $region43: #{conv_block_noact_forward.2} parent=5 // pred_region
      %s566 = ssub.s32 %s10, 2
      // Predicated region
      $region45: #{conv_block_noact_forward.2} parent=43 // pred_check
        %p567 = pneg %p128
      $region46: #{conv_block_noact_forward.2} parent=43 // pred_check_branch
        %569 = sbr.rel (%p567) target = $region48
      $region47: #{conv_block_noact_forward.2} parent=43 // pred_region
        %s570 = smul.u32 16, %s16
        %p571 = scmp.lt.s32.totalorder %s570, 63
        %s572 = scalar_select %p571, %s570, 63
        %s573 = smul.addr %s572, 4
        %s574 = scalar_lea.vmem %s4, %s573
      $region48: #{conv_block_noact_forward.2} parent=43 // pred_fallthru
        _
    $region44: #{conv_block_noact_forward.2} parent=5 // pred_fallthru
      _
  $region6: #{conv_block_noact_forward.2} parent=0 // loop_footer
    %s14 = sadd.s32 1, %s10
  $region7: #{conv_block_noact_forward.2} parent=0 // loop_footer_branch
    %9 = sbr.rel target = $region3
  $region8: #{conv_block_noact_forward.2} parent=0 // loop_exit
    _

// kernel: conv_block_noact_forward.3
$region0: #{conv_block_noact_forward.3}
  #allocation0 [shape = 'u32[]', space=smem, size = 0x4, offset = 0x4, fixed_abs, tag = 'smem constant byte address 0x4 - core index']
  #allocation1 [shape = 'u32[144,128]{1,0:T(1,128)}', space=vmem, size = 0x12000, scoped, tag = 'internal scratch']
  %s0 = inlined_call_operand.vmem [shape: bf16[512,256], index: 0, kind: input, shape index: {}]
  %s1 = inlined_call_operand.vmem [shape: bf16[256,128], index: 1, kind: input, shape index: {}]
  %s2 = inlined_call_operand.vmem [shape: bf16[128,128], index: 2, kind: input, shape index: {}]
  %s3 = inlined_call_operand.vmem [shape: f32[1,128], index: 3, kind: input, shape index: {}]
  %s4 = inlined_call_operand.hbm [shape: f32[512,128], index: 4, kind: output, shape index: {}]
  %s5 = sld [smem:[#allocation0]]
  $region49: #{conv_block_noact_forward.3} parent=0
    _
  %s7 = ssub.s32 1, %s5
  %s8 = scalar_select 0, %s7, %s5
  $region1: #{conv_block_noact_forward.3} parent=0
    #allocation2 [shape = 'u8[131072]{0}', space=vmem, size = 0x20000, scoped, tag = 'output window, operand 0']
    #allocation3 [shape = 's32[2]{0}', space=sflag, size = 0x8, scoped, tag = 'scoped memory for conv_block_noact_forward.3']
    %9 = vsyncpa [#allocation3], 0
    %s10 = scalar_lea.sflag [#allocation3], 1
    %11 = vsyncpa %s10, 0
    loop: start=0, step=1, limit=6
    $region2: #{conv_block_noact_forward.3} parent=1 // loop_pre_header
      _
    $region3: #{conv_block_noact_forward.3} parent=1 // loop_header
      %s13 = sphi 0, %s17
      %p14 = scmp.ge.s32.totalorder %s13, 6
      %s23 = sphi 0, %s25
      %s26 = sphi 0, %s23
      %s27 = sphi 0, %s26
      %s43 = sphi 0, %s27
      %s47 = sphi 0, %s47
      %s49 = sphi 0, %s47
      %s50 = sphi 0, %s49
      %s64 = sphi 0, %s50
      %s68 = sphi 0, %s68
      %s70 = sphi 0, %s68
      %s71 = sphi 0, %s70
      %s85 = sphi 0, %s71
      %s89 = sphi 0, %s89
      %s91 = sphi 0, %s89
      %s92 = sphi 0, %s91
      %s106 = sphi 0, %s92
      %s112 = sphi 0, %s114
      %s115 = sphi 0, %s112
      %s116 = sphi 0, %s115
      %s132 = sphi 0, %s116
    $region4: #{conv_block_noact_forward.3} parent=1 // loop_header_branch
      %16 = sbr.rel (%p14) target = $region8
    $region5: #{conv_block_noact_forward.3} parent=1 // loop_body
      %s18 = ssub.s32 %s13, 1
      %s19 = ssub.s32 %s13, 2
      %s20 = sadd.s32 %s13, 1
      %s21 = ssub.s32 %s13, %s20
      %p22 = scmp.eq.s32.totalorder %s21, 0
      %s24 = sadd.s32 %s23, 1
      %s25 = scalar_select %p22, %s23, %s24
      %p28 = pneg %p22
      %p29 = scmp.eq.s32.totalorder %s13, 3
      %p30 = por %p28, %p29
      %p31 = scmp.ne.s32.totalorder %s23, %s26
      %p32 = scmp.eq.s32.totalorder %s13, 0
      %p33 = por %p31, %p32
      %p34 = scmp.ne.s32.totalorder %s23, %s26
      %p35 = scmp.eq.s32.totalorder %s18, 3
      %p36 = por %p34, %p35
      %p37 = scmp.ne.s32.totalorder %s26, %s27
      %p38 = scmp.eq.s32.totalorder %s18, 0
      %p39 = por %p37, %p38
      %p40 = scmp.ne.s32.totalorder %s26, %s27
      %p41 = scmp.eq.s32.totalorder %s19, 3
      %p42 = por %p40, %p41
      %p44 = scmp.ne.s32.totalorder %s27, %s43
      %p45 = scmp.eq.s32.totalorder %s19, 0
      %p46 = por %p44, %p45
      %s48 = sadd.s32 %s47, 1
      %p51 = scmp.eq.s32.totalorder %s13, 3
      %p52 = scmp.ne.s32.totalorder %s47, %s49
      %p53 = scmp.eq.s32.totalorder %s13, 0
      %p54 = por %p52, %p53
      %p55 = scmp.ne.s32.totalorder %s47, %s49
      %p56 = scmp.eq.s32.totalorder %s18, 3
      %p57 = por %p55, %p56
      %p58 = scmp.ne.s32.totalorder %s49, %s50
      %p59 = scmp.eq.s32.totalorder %s18, 0
      %p60 = por %p58, %p59
      %p61 = scmp.ne.s32.totalorder %s49, %s50
      %p62 = scmp.eq.s32.totalorder %s19, 3
      %p63 = por %p61, %p62
      %p65 = scmp.ne.s32.totalorder %s50, %s64
      %p66 = scmp.eq.s32.totalorder %s19, 0
      %p67 = por %p65, %p66
      %s69 = sadd.s32 %s68, 1
      %p72 = scmp.eq.s32.totalorder %s13, 3
      %p73 = scmp.ne.s32.totalorder %s68, %s70
      %p74 = scmp.eq.s32.totalorder %s13, 0
      %p75 = por %p73, %p74
      %p76 = scmp.ne.s32.totalorder %s68, %s70
      %p77 = scmp.eq.s32.totalorder %s18, 3
      %p78 = por %p76, %p77
      %p79 = scmp.ne.s32.totalorder %s70, %s71
      %p80 = scmp.eq.s32.totalorder %s18, 0
      %p81 = por %p79, %p80
      %p82 = scmp.ne.s32.totalorder %s70, %s71
      %p83 = scmp.eq.s32.totalorder %s19, 3
      %p84 = por %p82, %p83
      %p86 = scmp.ne.s32.totalorder %s71, %s85
      %p87 = scmp.eq.s32.totalorder %s19, 0
      %p88 = por %p86, %p87
      %s90 = sadd.s32 %s89, 1
      %p93 = scmp.eq.s32.totalorder %s13, 3
      %p94 = scmp.ne.s32.totalorder %s89, %s91
      %p95 = scmp.eq.s32.totalorder %s13, 0
      %p96 = por %p94, %p95
      %p97 = scmp.ne.s32.totalorder %s89, %s91
      %p98 = scmp.eq.s32.totalorder %s18, 3
      %p99 = por %p97, %p98
      %p100 = scmp.ne.s32.totalorder %s91, %s92
      %p101 = scmp.eq.s32.totalorder %s18, 0
      %p102 = por %p100, %p101
      %p103 = scmp.ne.s32.totalorder %s91, %s92
      %p104 = scmp.eq.s32.totalorder %s19, 3
      %p105 = por %p103, %p104
      %p107 = scmp.ne.s32.totalorder %s92, %s106
      %p108 = scmp.eq.s32.totalorder %s19, 0
      %p109 = por %p107, %p108
      %s110 = ssub.s32 %s13, %s20
      %p111 = scmp.eq.s32.totalorder %s110, 0
      %s113 = sadd.s32 %s112, 1
      %s114 = scalar_select %p111, %s112, %s113
      %p117 = pneg %p111
      %p118 = scmp.eq.s32.totalorder %s13, 3
      %p119 = por %p117, %p118
      %p120 = scmp.ne.s32.totalorder %s112, %s115
      %p121 = scmp.eq.s32.totalorder %s13, 0
      %p122 = por %p120, %p121
      %p123 = scmp.ne.s32.totalorder %s112, %s115
      %p124 = scmp.eq.s32.totalorder %s18, 3
      %p125 = por %p123, %p124
      %p126 = scmp.ne.s32.totalorder %s115, %s116
      %p127 = scmp.eq.s32.totalorder %s18, 0
      %p128 = por %p126, %p127
      %p129 = scmp.ne.s32.totalorder %s115, %s116
      %p130 = scmp.eq.s32.totalorder %s19, 3
      %p131 = por %p129, %p130
      %p133 = scmp.ne.s32.totalorder %s116, %s132
      %p134 = scmp.eq.s32.totalorder %s19, 0
      %p135 = por %p133, %p134
      %p136 = scmp.le.s32.totalorder 1, %s13
      %p137 = scmp.lt.s32.totalorder %s13, 5
      %p138 = pnand %p136, %p137
      %p139 = pneg %p138
      // Predicated region
      $region9: #{conv_block_noact_forward.3} parent=5 // pred_check
        _
      $region10: #{conv_block_noact_forward.3} parent=5 // pred_check_branch
        %141 = sbr.rel (%p138) target = $region12
      $region11: #{conv_block_noact_forward.3} parent=5 // pred_region
        %s142 = ssub.s32 %s13, 1
        // Predicated region
        $region13: #{conv_block_noact_forward.3} parent=11 // pred_check
          %p143 = pneg %p60
        $region14: #{conv_block_noact_forward.3} parent=11 // pred_check_branch
          %145 = sbr.rel (%p143) target = $region16
        $region15: #{conv_block_noact_forward.3} parent=11 // pred_region
          _
        $region16: #{conv_block_noact_forward.3} parent=11 // pred_fallthru
          _
        // Predicated region
        $region17: #{conv_block_noact_forward.3} parent=11 // pred_check
          %p146 = pneg %p81
        $region18: #{conv_block_noact_forward.3} parent=11 // pred_check_branch
          %148 = sbr.rel (%p146) target = $region20
        $region19: #{conv_block_noact_forward.3} parent=11 // pred_region
          _
        $region20: #{conv_block_noact_forward.3} parent=11 // pred_fallthru
          _
        // Predicated region
        $region21: #{conv_block_noact_forward.3} parent=11 // pred_check
          %p149 = pneg %p102
        $region22: #{conv_block_noact_forward.3} parent=11 // pred_check_branch
          %151 = sbr.rel (%p149) target = $region24
        $region23: #{conv_block_noact_forward.3} parent=11 // pred_region
          _
        $region24: #{conv_block_noact_forward.3} parent=11 // pred_fallthru
          _
      $region12: #{conv_block_noact_forward.3} parent=5 // pred_fallthru
        _
      %p152 = scmp.lt.s32.totalorder %s13, 4
      // Predicated region
      $region25: #{conv_block_noact_forward.3} parent=5 // pred_check
        %p153 = pneg %p152
      $region26: #{conv_block_noact_forward.3} parent=5 // pred_check_branch
        %155 = sbr.rel (%p153) target = $region28
      $region27: #{conv_block_noact_forward.3} parent=5 // pred_region
        // Predicated region
        $region29: #{conv_block_noact_forward.3} parent=27 // pred_check
          %p156 = pneg %p33
        $region30: #{conv_block_noact_forward.3} parent=27 // pred_check_branch
          %158 = sbr.rel (%p156) target = $region32
        $region31: #{conv_block_noact_forward.3} parent=27 // pred_region
          %s159 = smul.u32 16, %s13
          %p160 = scmp.lt.s32.totalorder %s159, 63
          %s161 = scalar_select %p160, %s159, 63
          %s162 = smul.addr %s161, 2
          %s163 = smul.addr %s162, 4
          %s164 = scalar_lea.vmem %s0, %s163
          %s165 = smul.u32 16, %s13
        $region32: #{conv_block_noact_forward.3} parent=27 // pred_fallthru
          _
      $region28: #{conv_block_noact_forward.3} parent=5 // pred_fallthru
        _
      %p166 = scmp.le.s32.totalorder 1, %s13
      %p167 = scmp.lt.s32.totalorder %s13, 5
      %p168 = pnand %p166, %p167
      %p169 = pneg %p168
      // Predicated region
      $region33: #{conv_block_noact_forward.3} parent=5 // pred_check
        _
      $region34: #{conv_block_noact_forward.3} parent=5 // pred_check_branch
        %171 = sbr.rel (%p168) target = $region36
      $region35: #{conv_block_noact_forward.3} parent=5 // pred_region
        %s172 = ssub.s32 %s13, 1
        %s173 = smul.u32 16, %s18
        %p174 = scmp.lt.s32.totalorder %s173, 63
        %s175 = scalar_select %p174, %s173, 63
        %s176 = smul.addr %s175, 2
        %s177 = smul.addr %s176, 4
        %s178 = scalar_lea.vmem %s0, %s177
        %p179 = pneg %p39
        %p180 = pneg %p36
        %p181 = pneg %p60
        %p182 = pneg %p57
        %p183 = pneg %p81
        %p184 = pneg %p78
        %p185 = pneg %p102
        %p186 = pneg %p99
        %p187 = pneg %p128
        %p188 = pneg %p125
        %s189 = sand.u32 %s115, 1
        %s190 = scalar_lea.sflag [#allocation3], %s189
        %s191 = sand.u32 %s115, 1
        %s192 = smul.addr %s191, 128
        %s193 = scalar_lea.vmem [#allocation2], %s192
        %s194 = smul.u32 16, %s18
        %p195 = scmp.lt.s32.totalorder %s194, 63
        %s196 = scalar_select %p195, %s194, 63
        %s197 = smul.addr %s196, 2
        %s198 = smul.addr %s197, 4
        %s199 = scalar_lea.vmem %s0, %s198
        %s200 = smul.u32 16, %s18
        %s201 = smul.u32 16, %s18
        %v203 = vld [vmem:[%s199] sm:$0xff]
        %v204 = vld [vmem:[%s199 + $0x8] sm:$0xff]
        %v205 = vld [vmem:[%s199 + $0x10] sm:$0xff]
        %v206 = vld [vmem:[%s199 + $0x18] sm:$0xff]
        %v207 = vld [vmem:[%s199 + $0x20] sm:$0xff]
        %v208 = vld [vmem:[%s199 + $0x28] sm:$0xff]
        %v209 = vld [vmem:[%s199 + $0x30] sm:$0xff]
        %v210 = vld [vmem:[%s199 + $0x38] sm:$0xff]
        %v211 = vld [vmem:[%s199 + $0x40] sm:$0xff]
        %v212 = vld [vmem:[%s199 + $0x48] sm:$0xff]
        %v213 = vld [vmem:[%s199 + $0x50] sm:$0xff]
        %v214 = vld [vmem:[%s199 + $0x58] sm:$0xff]
        %v215 = vld [vmem:[%s199 + $0x60] sm:$0xff]
        %v216 = vld [vmem:[%s199 + $0x68] sm:$0xff]
        %v217 = vld [vmem:[%s199 + $0x70] sm:$0xff]
        %v218 = vld [vmem:[%s199 + $0x78] sm:$0xff]
        %v219 = vld [vmem:[%s1] sm:$0xf]
        %v220 = vld [vmem:[%s1 + $0x4] sm:$0xf]
        %v221 = vld [vmem:[%s1 + $0x8] sm:$0xf]
        %v222 = vld [vmem:[%s1 + $0xc] sm:$0xf]
        %v223 = vld [vmem:[%s1 + $0x10] sm:$0xf]
        %v224 = vld [vmem:[%s1 + $0x14] sm:$0xf]
        %v225 = vld [vmem:[%s1 + $0x18] sm:$0xf]
        %v226 = vld [vmem:[%s1 + $0x1c] sm:$0xf]
        %v227 = vld [vmem:[%s1 + $0x20] sm:$0xf]
        %v228 = vld [vmem:[%s1 + $0x24] sm:$0xf]
        %v229 = vld [vmem:[%s1 + $0x28] sm:$0xf]
        %v230 = vld [vmem:[%s1 + $0x2c] sm:$0xf]
        %v231 = vld [vmem:[%s1 + $0x30] sm:$0xf]
        %v232 = vld [vmem:[%s1 + $0x34] sm:$0xf]
        %v233 = vld [vmem:[%s1 + $0x38] sm:$0xf]
        %v234 = vld [vmem:[%s1 + $0x3c] sm:$0xf]
        %v235 = vld [vmem:[%s1 + $0x40] sm:$0xf]
        %v236 = vld [vmem:[%s1 + $0x44] sm:$0xf]
        %v237 = vld [vmem:[%s1 + $0x48] sm:$0xf]
        %v238 = vld [vmem:[%s1 + $0x4c] sm:$0xf]
        %v239 = vld [vmem:[%s1 + $0x50] sm:$0xf]
        %v240 = vld [vmem:[%s1 + $0x54] sm:$0xf]
        %v241 = vld [vmem:[%s1 + $0x58] sm:$0xf]
        %v242 = vld [vmem:[%s1 + $0x5c] sm:$0xf]
        %v243 = vld [vmem:[%s1 + $0x60] sm:$0xf]
        %v244 = vld [vmem:[%s1 + $0x64] sm:$0xf]
        %v245 = vld [vmem:[%s1 + $0x68] sm:$0xf]
        %v246 = vld [vmem:[%s1 + $0x6c] sm:$0xf]
        %v247 = vld [vmem:[%s1 + $0x70] sm:$0xf]
        %v248 = vld [vmem:[%s1 + $0x74] sm:$0xf]
        %v249 = vld [vmem:[%s1 + $0x78] sm:$0xf]
        %v250 = vld [vmem:[%s1 + $0x7c] sm:$0xf]
        %v267 = vunpack.c.l.b16 %v203
        %v268 = vunpack.c.h.b16 %v203
        %v269 = vunpack.c.l.b16 %v204
        %v270 = vunpack.c.h.b16 %v204
        %v271 = vunpack.c.l.b16 %v205
        %v272 = vunpack.c.h.b16 %v205
        %v273 = vunpack.c.l.b16 %v206
        %v274 = vunpack.c.h.b16 %v206
        %v275 = vunpack.c.l.b16 %v207
        %v276 = vunpack.c.h.b16 %v207
        %v277 = vunpack.c.l.b16 %v208
        %v278 = vunpack.c.h.b16 %v208
        %v279 = vunpack.c.l.b16 %v209
        %v280 = vunpack.c.h.b16 %v209
        %v281 = vunpack.c.l.b16 %v210
        %v282 = vunpack.c.h.b16 %v210
        %v283 = vunpack.c.l.b16 %v211
        %v284 = vunpack.c.h.b16 %v211
        %v285 = vunpack.c.l.b16 %v212
        %v286 = vunpack.c.h.b16 %v212
        %v287 = vunpack.c.l.b16 %v213
        %v288 = vunpack.c.h.b16 %v213
        %v289 = vunpack.c.l.b16 %v214
        %v290 = vunpack.c.h.b16 %v214
        %v291 = vunpack.c.l.b16 %v215
        %v292 = vunpack.c.h.b16 %v215
        %v293 = vunpack.c.l.b16 %v216
        %v294 = vunpack.c.h.b16 %v216
        %v295 = vunpack.c.l.b16 %v217
        %v296 = vunpack.c.h.b16 %v217
        %v297 = vunpack.c.l.b16 %v218
        %v298 = vunpack.c.h.b16 %v218
        %v299 = vpack.c.b16 %v269, %v267
        %v300 = vpack.c.b16 %v270, %v268
        %v301 = vpack.c.b16 %v273, %v271
        %v302 = vpack.c.b16 %v274, %v272
        %v303 = vpack.c.b16 %v277, %v275
        %v304 = vpack.c.b16 %v278, %v276
        %v305 = vpack.c.b16 %v281, %v279
        %v306 = vpack.c.b16 %v282, %v280
        %v307 = vpack.c.b16 %v285, %v283
        %v308 = vpack.c.b16 %v286, %v284
        %v309 = vpack.c.b16 %v289, %v287
        %v310 = vpack.c.b16 %v290, %v288
        %v311 = vpack.c.b16 %v293, %v291
        %v312 = vpack.c.b16 %v294, %v292
        %v313 = vpack.c.b16 %v297, %v295
        %v314 = vpack.c.b16 %v298, %v296
        %v363 = vunpack.c.l.b16 %v219
        %v364 = vunpack.c.l.b16 %v220
        %v365 = vunpack.c.l.b16 %v221
        %v366 = vunpack.c.l.b16 %v222
        %v367 = vunpack.c.l.b16 %v223
        %v368 = vunpack.c.l.b16 %v224
        %v369 = vunpack.c.l.b16 %v225
        %v370 = vunpack.c.l.b16 %v226
        %v371 = vunpack.c.l.b16 %v227
        %v372 = vunpack.c.l.b16 %v228
        %v373 = vunpack.c.l.b16 %v229
        %v374 = vunpack.c.l.b16 %v230
        %v375 = vunpack.c.l.b16 %v231
        %v376 = vunpack.c.l.b16 %v232
        %v377 = vunpack.c.l.b16 %v233
        %v378 = vunpack.c.l.b16 %v234
        %v379 = vunpack.c.l.b16 %v235
        %v380 = vunpack.c.l.b16 %v236
        %v381 = vunpack.c.l.b16 %v237
        %v382 = vunpack.c.l.b16 %v238
        %v383 = vunpack.c.l.b16 %v239
        %v384 = vunpack.c.l.b16 %v240
        %v385 = vunpack.c.l.b16 %v241
        %v386 = vunpack.c.l.b16 %v242
        %v387 = vunpack.c.l.b16 %v243
        %v388 = vunpack.c.l.b16 %v244
        %v389 = vunpack.c.l.b16 %v245
        %v390 = vunpack.c.l.b16 %v246
        %v391 = vunpack.c.l.b16 %v247
        %v392 = vunpack.c.l.b16 %v248
        %v393 = vunpack.c.l.b16 %v249
        %v394 = vunpack.c.l.b16 %v250
        %v395 = vpack.c.b16 %v364, %v363
        %v396 = vpack.c.b16 %v366, %v365
        %v397 = vpack.c.b16 %v368, %v367
        %v398 = vpack.c.b16 %v370, %v369
        %v399 = vpack.c.b16 %v372, %v371
        %v400 = vpack.c.b16 %v374, %v373
        %v401 = vpack.c.b16 %v376, %v375
        %v402 = vpack.c.b16 %v378, %v377
        %v403 = vpack.c.b16 %v380, %v379
        %v404 = vpack.c.b16 %v382, %v381
        %v405 = vpack.c.b16 %v384, %v383
        %v406 = vpack.c.b16 %v386, %v385
        %v407 = vpack.c.b16 %v388, %v387
        %v408 = vpack.c.b16 %v390, %v389
        %v409 = vpack.c.b16 %v392, %v391
        %v410 = vpack.c.b16 %v394, %v393
        %427 = vmatprep.subr.bf16.mxu0 0
        %428 = vmatpush1.bf16.msra.mxu0 %v395
        %429 = vmatprep.subr.bf16.mxu0 0
        %430 = vmatpush1.bf16.msra.mxu0 %v396
        %431 = vmatprep.subr.bf16.mxu0 0
        %432 = vmatpush1.bf16.msra.mxu0 %v397
        %433 = vmatprep.subr.bf16.mxu0 0
        %434 = vmatpush1.bf16.msra.mxu0 %v398
        %435 = vmatprep.subr.bf16.mxu0 0
        %436 = vmatpush1.bf16.msra.mxu0 %v399
        %437 = vmatprep.subr.bf16.mxu0 0
        %438 = vmatpush1.bf16.msra.mxu0 %v400
        %439 = vmatprep.subr.bf16.mxu0 0
        %440 = vmatpush1.bf16.msra.mxu0 %v401
        %441 = vmatprep.subr.bf16.mxu0 0
        %442 = vmatpush1.bf16.msra.mxu0 %v402
        %443 = vmatprep.subr.bf16.mxu0 0
        %444 = vmatpush1.bf16.msra.mxu0 %v403
        %445 = vmatprep.subr.bf16.mxu0 0
        %446 = vmatpush1.bf16.msra.mxu0 %v404
        %447 = vmatprep.subr.bf16.mxu0 0
        %448 = vmatpush1.bf16.msra.mxu0 %v405
        %449 = vmatprep.subr.bf16.mxu0 0
        %450 = vmatpush1.bf16.msra.mxu0 %v406
        %451 = vmatprep.subr.bf16.mxu0 0
        %452 = vmatpush1.bf16.msra.mxu0 %v407
        %453 = vmatprep.subr.bf16.mxu0 0
        %454 = vmatpush1.bf16.msra.mxu0 %v408
        %455 = vmatprep.subr.bf16.mxu0 0
        %456 = vmatpush1.bf16.msra.mxu0 %v409
        %457 = vmatprep.subr.bf16.mxu0 0
        %458 = vmatpush1.bf16.msra.mxu0 %v410
        %459 = vmatprep.mubr.bf16.mxu0 %v300
        %460 = vmatmul.mubr.bf16.gmra.mrb[0].mxu0 %v299
        %v461 = vpop.f32.mrb[0].mxu0
        %v462 = vadd.f32 0.0, %v461
        %v463 = vpop.f32.mrb[0].mxu0
        %v464 = vpop.f32.mrb[0].mxu0
        %v465 = vadd.f32 0.0, %v464
        %v466 = vpop.f32.mrb[0].mxu0
        %467 = vmatprep.mubr.bf16.mxu0 %v302
        %468 = vmatmul.mubr.bf16.gmra.mrb[0].mxu0 %v301
        %v469 = vpop.f32.mrb[0].mxu0
        %v470 = vadd.f32 0.0, %v469
        %v471 = vpop.f32.mrb[0].mxu0
        %v472 = vpop.f32.mrb[0].mxu0
        %v473 = vadd.f32 0.0, %v472
        %v474 = vpop.f32.mrb[0].mxu0
        %475 = vmatprep.mubr.bf16.mxu0 %v304
        %476 = vmatmul.mubr.bf16.gmra.mrb[0].mxu0 %v303
        %v477 = vpop.f32.mrb[0].mxu0
        %v478 = vadd.f32 0.0, %v477
        %v479 = vpop.f32.mrb[0].mxu0
        %v480 = vpop.f32.mrb[0].mxu0
        %v481 = vadd.f32 0.0, %v480
        %v482 = vpop.f32.mrb[0].mxu0
        %483 = vmatprep.mubr.bf16.mxu0 %v306
        %484 = vmatmul.mubr.bf16.gmra.mrb[0].mxu0 %v305
        %v485 = vpop.f32.mrb[0].mxu0
        %v486 = vadd.f32 0.0, %v485
        %v487 = vpop.f32.mrb[0].mxu0
        %v488 = vpop.f32.mrb[0].mxu0
        %v489 = vadd.f32 0.0, %v488
        %v490 = vpop.f32.mrb[0].mxu0
        %491 = vmatprep.mubr.bf16.mxu0 %v308
        %492 = vmatmul.mubr.bf16.gmra.mrb[0].mxu0 %v307
        %v493 = vpop.f32.mrb[0].mxu0
        %v494 = vadd.f32 0.0, %v493
        %v495 = vpop.f32.mrb[0].mxu0
        %v496 = vpop.f32.mrb[0].mxu0
        %v497 = vadd.f32 0.0, %v496
        %v498 = vpop.f32.mrb[0].mxu0
        %499 = vmatprep.mubr.bf16.mxu0 %v310
        %500 = vmatmul.mubr.bf16.gmra.mrb[0].mxu0 %v309
        %v501 = vpop.f32.mrb[0].mxu0
        %v502 = vadd.f32 0.0, %v501
        %v503 = vpop.f32.mrb[0].mxu0
        %v504 = vpop.f32.mrb[0].mxu0
        %v505 = vadd.f32 0.0, %v504
        %v506 = vpop.f32.mrb[0].mxu0
        %507 = vmatprep.mubr.bf16.mxu0 %v312
        %508 = vmatmul.mubr.bf16.gmra.mrb[0].mxu0 %v311
        %v509 = vpop.f32.mrb[0].mxu0
        %v510 = vadd.f32 0.0, %v509
        %v511 = vpop.f32.mrb[0].mxu0
        %v512 = vpop.f32.mrb[0].mxu0
        %v513 = vadd.f32 0.0, %v512
        %v514 = vpop.f32.mrb[0].mxu0
        %515 = vmatprep.mubr.bf16.mxu0 %v314
        %516 = vmatmul.mubr.bf16.gmra.mrb[0].mxu0 %v313
        %v517 = vpop.f32.mrb[0].mxu0
        %v518 = vadd.f32 0.0, %v517
        %v519 = vpop.f32.mrb[0].mxu0
        %v520 = vpop.f32.mrb[0].mxu0
        %v521 = vadd.f32 0.0, %v520
        %v522 = vpop.f32.mrb[0].mxu0
        %523 = vdwg.mxu0
        %v524 = vpack.c.bf16 %v465, %v462
        %v525 = vpack.c.bf16 %v473, %v470
        %v526 = vpack.c.bf16 %v481, %v478
        %v527 = vpack.c.bf16 %v489, %v486
        %v528 = vpack.c.bf16 %v497, %v494
        %v529 = vpack.c.bf16 %v505, %v502
        %v530 = vpack.c.bf16 %v513, %v510
        %v531 = vpack.c.bf16 %v521, %v518
        %v532 = vld [vmem:[%s2] sm:$0xf]
        %v533 = vld [vmem:[%s2 + $0x4] sm:$0xf]
        %v534 = vld [vmem:[%s2 + $0x8] sm:$0xf]
        %v535 = vld [vmem:[%s2 + $0xc] sm:$0xf]
        %v536 = vld [vmem:[%s2 + $0x10] sm:$0xf]
        %v537 = vld [vmem:[%s2 + $0x14] sm:$0xf]
        %v538 = vld [vmem:[%s2 + $0x18] sm:$0xf]
        %v539 = vld [vmem:[%s2 + $0x1c] sm:$0xf]
        %v540 = vld [vmem:[%s2 + $0x20] sm:$0xf]
        %v541 = vld [vmem:[%s2 + $0x24] sm:$0xf]
        %v542 = vld [vmem:[%s2 + $0x28] sm:$0xf]
        %v543 = vld [vmem:[%s2 + $0x2c] sm:$0xf]
        %v544 = vld [vmem:[%s2 + $0x30] sm:$0xf]
        %v545 = vld [vmem:[%s2 + $0x34] sm:$0xf]
        %v546 = vld [vmem:[%s2 + $0x38] sm:$0xf]
        %v547 = vld [vmem:[%s2 + $0x3c] sm:$0xf]
        %v548 = vld [vmem:[%s3] sm:$0x1]
        %v550 = vlaneseq
        %v551 = vshrl.u32 %v550, 7
        %v552 = vsub.s32 0, %v551
        %v553 = vrot.slane %v548, %v552
        %v571 = vunpack.c.l.b16 %v532
        %v572 = vunpack.c.l.b16 %v533
        %v573 = vunpack.c.l.b16 %v534
        %v574 = vunpack.c.l.b16 %v535
        %v575 = vunpack.c.l.b16 %v536
        %v576 = vunpack.c.l.b16 %v537
        %v577 = vunpack.c.l.b16 %v538
        %v578 = vunpack.c.l.b16 %v539
        %v579 = vunpack.c.l.b16 %v540
        %v580 = vunpack.c.l.b16 %v541
        %v581 = vunpack.c.l.b16 %v542
        %v582 = vunpack.c.l.b16 %v543
        %v583 = vunpack.c.l.b16 %v544
        %v584 = vunpack.c.l.b16 %v545
        %v585 = vunpack.c.l.b16 %v546
        %v586 = vunpack.c.l.b16 %v547
        %v587 = vpack.c.b16 %v572, %v571
        %v588 = vpack.c.b16 %v574, %v573
        %v589 = vpack.c.b16 %v576, %v575
        %v590 = vpack.c.b16 %v578, %v577
        %v591 = vpack.c.b16 %v580, %v579
        %v592 = vpack.c.b16 %v582, %v581
        %v593 = vpack.c.b16 %v584, %v583
        %v594 = vpack.c.b16 %v586, %v585
        %603 = vmatprep.subr.bf16.mxu0 0
        %604 = vmatpush1.bf16.msra.mxu0 %v587
        %605 = vmatprep.subr.bf16.mxu0 0
        %606 = vmatpush1.bf16.msra.mxu0 %v588
        %607 = vmatprep.subr.bf16.mxu0 0
        %608 = vmatpush1.bf16.msra.mxu0 %v589
        %609 = vmatprep.subr.bf16.mxu0 0
        %610 = vmatpush1.bf16.msra.mxu0 %v590
        %611 = vmatprep.subr.bf16.mxu0 0
        %612 = vmatpush1.bf16.msra.mxu0 %v591
        %613 = vmatprep.subr.bf16.mxu0 0
        %614 = vmatpush1.bf16.msra.mxu0 %v592
        %615 = vmatprep.subr.bf16.mxu0 0
        %616 = vmatpush1.bf16.msra.mxu0 %v593
        %617 = vmatprep.subr.bf16.mxu0 0
        %618 = vmatpush1.bf16.msra.mxu0 %v594
        %619 = vmatprep.subr.bf16.mxu0 0
        %620 = vmatpush1.bf16.msra.mxu0 0
        %621 = vmatprep.subr.bf16.mxu0 0
        %622 = vmatpush1.bf16.msra.mxu0 0
        %623 = vmatprep.subr.bf16.mxu0 0
        %624 = vmatpush1.bf16.msra.mxu0 0
        %625 = vmatprep.subr.bf16.mxu0 0
        %626 = vmatpush1.bf16.msra.mxu0 0
        %627 = vmatprep.subr.bf16.mxu0 0
        %628 = vmatpush1.bf16.msra.mxu0 0
        %629 = vmatprep.subr.bf16.mxu0 0
        %630 = vmatpush1.bf16.msra.mxu0 0
        %631 = vmatprep.subr.bf16.mxu0 0
        %632 = vmatpush1.bf16.msra.mxu0 0
        %633 = vmatprep.subr.bf16.mxu0 0
        %634 = vmatpush1.bf16.msra.mxu0 0
        %635 = vmatprep.mubr.bf16.mxu0 0
        %636 = vmatmul.mubr.bf16.gmra.mrb[0].mxu0 %v524
        %v637 = vpop.f32.mrb[0].mxu0
        %v638 = vadd.f32 %v553, %v637
        %v639 = vpop.f32.mrb[0].mxu0
        %v640 = vpop.f32.mrb[0].mxu0
        %v641 = vadd.f32 %v553, %v640
        %v642 = vpop.f32.mrb[0].mxu0
        %643 = vmatprep.mubr.bf16.mxu0 0
        %644 = vmatmul.mubr.bf16.gmra.mrb[0].mxu0 %v525
        %v645 = vpop.f32.mrb[0].mxu0
        %v646 = vadd.f32 %v553, %v645
        %v647 = vpop.f32.mrb[0].mxu0
        %v648 = vpop.f32.mrb[0].mxu0
        %v649 = vadd.f32 %v553, %v648
        %v650 = vpop.f32.mrb[0].mxu0
        %651 = vmatprep.mubr.bf16.mxu0 0
        %652 = vmatmul.mubr.bf16.gmra.mrb[0].mxu0 %v526
        %v653 = vpop.f32.mrb[0].mxu0
        %v654 = vadd.f32 %v553, %v653
        %v655 = vpop.f32.mrb[0].mxu0
        %v656 = vpop.f32.mrb[0].mxu0
        %v657 = vadd.f32 %v553, %v656
        %v658 = vpop.f32.mrb[0].mxu0
        %659 = vmatprep.mubr.bf16.mxu0 0
        %660 = vmatmul.mubr.bf16.gmra.mrb[0].mxu0 %v527
        %v661 = vpop.f32.mrb[0].mxu0
        %v662 = vadd.f32 %v553, %v661
        %v663 = vpop.f32.mrb[0].mxu0
        %v664 = vpop.f32.mrb[0].mxu0
        %v665 = vadd.f32 %v553, %v664
        %v666 = vpop.f32.mrb[0].mxu0
        %667 = vmatprep.mubr.bf16.mxu0 0
        %668 = vmatmul.mubr.bf16.gmra.mrb[0].mxu0 %v528
        %v669 = vpop.f32.mrb[0].mxu0
        %v670 = vadd.f32 %v553, %v669
        %v671 = vpop.f32.mrb[0].mxu0
        %v672 = vpop.f32.mrb[0].mxu0
        %v673 = vadd.f32 %v553, %v672
        %v674 = vpop.f32.mrb[0].mxu0
        %675 = vmatprep.mubr.bf16.mxu0 0
        %676 = vmatmul.mubr.bf16.gmra.mrb[0].mxu0 %v529
        %v677 = vpop.f32.mrb[0].mxu0
        %v678 = vadd.f32 %v553, %v677
        %v679 = vpop.f32.mrb[0].mxu0
        %v680 = vpop.f32.mrb[0].mxu0
        %v681 = vadd.f32 %v553, %v680
        %v682 = vpop.f32.mrb[0].mxu0
        %683 = vmatprep.mubr.bf16.mxu0 0
        %684 = vmatmul.mubr.bf16.gmra.mrb[0].mxu0 %v530
        %v685 = vpop.f32.mrb[0].mxu0
        %v686 = vadd.f32 %v553, %v685
        %v687 = vpop.f32.mrb[0].mxu0
        %v688 = vpop.f32.mrb[0].mxu0
        %v689 = vadd.f32 %v553, %v688
        %v690 = vpop.f32.mrb[0].mxu0
        %691 = vmatprep.mubr.bf16.mxu0 0
        %692 = vmatmul.mubr.bf16.gmra.mrb[0].mxu0 %v531
        %v693 = vpop.f32.mrb[0].mxu0
        %v694 = vadd.f32 %v553, %v693
        %v695 = vpop.f32.mrb[0].mxu0
        %v696 = vpop.f32.mrb[0].mxu0
        %v697 = vadd.f32 %v553, %v696
        %v698 = vpop.f32.mrb[0].mxu0
        %699 = vdwg.mxu0
        %700 = vst [vmem:[%s193] sm:$0xff] %v638
        %701 = vst [vmem:[%s193 + $0x8] sm:$0xff] %v641
        %702 = vst [vmem:[%s193 + $0x10] sm:$0xff] %v646
        %703 = vst [vmem:[%s193 + $0x18] sm:$0xff] %v649
        %704 = vst [vmem:[%s193 + $0x20] sm:$0xff] %v654
        %705 = vst [vmem:[%s193 + $0x28] sm:$0xff] %v657
        %706 = vst [vmem:[%s193 + $0x30] sm:$0xff] %v662
        %707 = vst [vmem:[%s193 + $0x38] sm:$0xff] %v665
        %708 = vst [vmem:[%s193 + $0x40] sm:$0xff] %v670
        %709 = vst [vmem:[%s193 + $0x48] sm:$0xff] %v673
        %710 = vst [vmem:[%s193 + $0x50] sm:$0xff] %v678
        %711 = vst [vmem:[%s193 + $0x58] sm:$0xff] %v681
        %712 = vst [vmem:[%s193 + $0x60] sm:$0xff] %v686
        %713 = vst [vmem:[%s193 + $0x68] sm:$0xff] %v689
        %714 = vst [vmem:[%s193 + $0x70] sm:$0xff] %v694
        %715 = vst [vmem:[%s193 + $0x78] sm:$0xff] %v697
        %s716 = sand.u32 %s115, 1
        %s717 = scalar_lea.sflag [#allocation3], %s716
        %s718 = sand.u32 %s115, 1
        %s719 = smul.addr %s718, 128
        %s720 = scalar_lea.vmem [#allocation2], %s719
        // Predicated region
        $region37: #{conv_block_noact_forward.3} parent=35 // pred_check
          %p721 = pneg %p125
        $region38: #{conv_block_noact_forward.3} parent=35 // pred_check_branch
          %723 = sbr.rel (%p721) target = $region40
        $region39: #{conv_block_noact_forward.3} parent=35 // pred_region
          %s724 = smul.u32 16, %s18
          %s726 = ssub.s32 2048, 2048
          %727 = vsyncadd %s717, %s726
          %s728 = smul.addr %s724, 128
          %s729 = scalar_lea.hbm %s4, %s728
          %s730 = sshll.u32 %s720, 4
          %s731 = int_to_ptr.vmem [resolvable:$true] %s730
          %736 = dma.vmem_to_hbm [thread:$0]  %s731, 2048, %s729, %s717, 128, 128, 8
        $region40: #{conv_block_noact_forward.3} parent=35 // pred_fallthru
          _
      $region36: #{conv_block_noact_forward.3} parent=5 // pred_fallthru
        _
      %p737 = scmp.le.s32.totalorder 2, %s13
      // Predicated region
      $region41: #{conv_block_noact_forward.3} parent=5 // pred_check
        %p738 = pneg %p737
      $region42: #{conv_block_noact_forward.3} parent=5 // pred_check_branch
        %740 = sbr.rel (%p738) target = $region44
      $region43: #{conv_block_noact_forward.3} parent=5 // pred_region
        %s741 = ssub.s32 %s13, 2
        // Predicated region
        $region45: #{conv_block_noact_forward.3} parent=43 // pred_check
          %p742 = pneg %p131
        $region46: #{conv_block_noact_forward.3} parent=43 // pred_check_branch
          %744 = sbr.rel (%p742) target = $region48
        $region47: #{conv_block_noact_forward.3} parent=43 // pred_region
          %s745 = sand.u32 %s116, 1
          %s746 = scalar_lea.sflag [#allocation3], %s745
          %s747 = sand.u32 %s116, 1
          %s748 = smul.addr %s747, 128
          %s749 = scalar_lea.vmem [#allocation2], %s748
          %750 = dma.done %s746, 2048
        $region48: #{conv_block_noact_forward.3} parent=43 // pred_fallthru
          _
      $region44: #{conv_block_noact_forward.3} parent=5 // pred_fallthru
        _
    $region6: #{conv_block_noact_forward.3} parent=1 // loop_footer
      %s17 = sadd.s32 1, %s13
    $region7: #{conv_block_noact_forward.3} parent=1 // loop_footer_branch
      %12 = sbr.rel target = $region3
    $region8: #{conv_block_noact_forward.3} parent=1 // loop_exit
      _
    %751 = vsyncpa [#allocation3], 1
    %s752 = scalar_lea.sflag [#allocation3], 1
    %753 = vsyncpa %s752, 1

</llo_original>
